<compile_context>
chip_gen: v6e
topology: v6e:2x2x1
jax: 0.10.0
libtpu: 0.0.40
codegen_flags: <defaults>
</compile_context>

<pallas_src>
import jax
import jax.numpy as jnp
from jax.experimental import pallas as pl
from jax.experimental.pallas import tpu as pltpu

_LANE = 128

# Layer order used for both the flattened kernel arguments and init.
_LAYERS = ("enc_1", "enc_2", "enc_3", "z_layer",
           "dec_1", "dec_2", "dec_3", "x_bar_layer")


def _round_up(n, m):
    return ((n + m - 1) // m) * m


def _ae_fused_kernel(x_ref,
                     w1_ref, b1_ref, w2_ref, b2_ref, w3_ref, b3_ref,
                     wz_ref, bz_ref,
                     wd1_ref, bd1_ref, wd2_ref, bd2_ref, wd3_ref, bd3_ref,
                     wx_ref, bx_ref,
                     xbar_ref, h1_ref, h2_ref, h3_ref, z_ref):
    """One batch tile: 8 fused (matmul + bias + optional ReLU) layers."""

    def lin(a, w_ref, b_ref, relu):
        # MXU matmul with f32 accumulation, bias broadcast (1, Dout) on VPU.
        y = jnp.dot(a, w_ref[...], preferred_element_type=jnp.float32)
        y = y + b_ref[...]
        if relu:
            y = jnp.maximum(y, 0.0)
        return y

    x = x_ref[...]
    h1 = lin(x,  w1_ref,  b1_ref,  True)
    h2 = lin(h1, w2_ref,  b2_ref,  True)
    h3 = lin(h2, w3_ref,  b3_ref,  True)
    z  = lin(h3, wz_ref,  bz_ref,  False)
    d1 = lin(z,  wd1_ref, bd1_ref, True)
    d2 = lin(d1, wd2_ref, bd2_ref, True)
    d3 = lin(d2, wd3_ref, bd3_ref, True)
    xb = lin(d3, wx_ref,  bx_ref,  False)

    # All outputs are padded to a multiple of 128 lanes -> unmasked stores.
    xbar_ref[...] = xb.astype(xbar_ref.dtype)
    h1_ref[...]   = h1.astype(h1_ref.dtype)
    h2_ref[...]   = h2.astype(h2_ref.dtype)
    h3_ref[...]   = h3.astype(h3_ref.dtype)
    z_ref[...]    = z.astype(z_ref.dtype)


def ae_forward(params, x, *, tb=128):
    """Matches AE.forward: returns (x_bar, enc_h1, enc_h2, enc_h3, z)."""
    B, n_input = x.shape
    n_in_pad = _round_up(n_input, _LANE)
    b_pad = _round_up(max(B, 1), tb)

    # Lane/batch pad the input once in the wrapper (cheap XLA pad).
    x_p = jnp.pad(x.astype(jnp.float32),
                  ((0, b_pad - B), (0, n_in_pad - n_input)))

    flat_inputs = [x_p]
    in_specs = [pl.BlockSpec((tb, n_in_pad), lambda i: (i, 0))]

    # Pad every weight/bias to 128-multiples; constant index_map keeps them
    # resident in VMEM across all batch-tile grid steps.
    for name in _LAYERS:
        w = params[name]["w"]
        b = params[name]["b"]
        din, dout = w.shape
        din_p, dout_p = _round_up(din, _LANE), _round_up(dout, _LANE)
        w_p = jnp.pad(w.astype(jnp.float32), ((0, din_p - din), (0, dout_p - dout)))
        b_p = jnp.pad(b.astype(jnp.float32), (0, dout_p - dout)).reshape(1, dout_p)
        flat_inputs += [w_p, b_p]
        in_specs += [pl.BlockSpec((din_p, dout_p), lambda i: (0, 0)),
                     pl.BlockSpec((1, dout_p), lambda i: (0, 0))]

    # Outputs (padded, lane-dense), in forward-return order.
    out_names = ("x_bar_layer", "enc_1", "enc_2", "enc_3", "z_layer")
    out_dims = tuple(_round_up(params[n]["w"].shape[1], _LANE) for n in out_names)
    out_shape = tuple(jax.ShapeDtypeStruct((b_pad, d), jnp.float32) for d in out_dims)
    out_specs = tuple(pl.BlockSpec((tb, d), lambda i: (i, 0)) for d in out_dims)

    outs = pl.pallas_call(
        _ae_fused_kernel,
        out_shape=out_shape,
        grid=(b_pad // tb,),
        in_specs=in_specs,
        out_specs=out_specs,
        compiler_params=pltpu.CompilerParams(
            dimension_semantics=("parallel",)),   # 2nd TC on v7x; no-op v5e/v6e
    )(*flat_inputs)

    xbar_p, h1_p, h2_p, h3_p, z_p = outs

    # Slice back to the logical (unpadded) shapes.
    x_bar  = xbar_p[:B, :n_input]
    enc_h1 = h1_p[:B, :params["enc_1"]["w"].shape[1]]
    enc_h2 = h2_p[:B, :params["enc_2"]["w"].shape[1]]
    enc_h3 = h3_p[:B, :params["enc_3"]["w"].shape[1]]
    z      = z_p[:B, :params["z_layer"]["w"].shape[1]]
    return x_bar, enc_h1, enc_h2, enc_h3, z


def init_ae_params(key, n_enc_1, n_enc_2, n_enc_3, n_dec_1, n_dec_2, n_dec_3,
                   n_input, n_z):
    """Deterministic init mimicking torch.nn.Linear's U(-1/sqrt(fan_in), +...)."""
    dims = [
        ("enc_1", n_input, n_enc_1),
        ("enc_2", n_enc_1, n_enc_2),
        ("enc_3", n_enc_2, n_enc_3),
        ("z_layer", n_enc_3, n_z),
        ("dec_1", n_z, n_dec_1),
        ("dec_2", n_dec_1, n_dec_2),
        ("dec_3", n_dec_2, n_dec_3),
        ("x_bar_layer", n_dec_3, n_input),
    ]
    params = {}
    for name, din, dout in dims:
        key, kw, kb = jax.random.split(key, 3)
        bound = 1.0 / jnp.sqrt(din)
        # stored as [in, out] (transpose of PyTorch's [out, in]) so the kernel
        # hot path is a single x @ W matmul.
        params[name] = {
            "w": jax.random.uniform(kw, (din, dout), jnp.float32, -bound, bound),
            "b": jax.random.uniform(kb, (dout,), jnp.float32, -bound, bound),
        }
    return params


if __name__ == "__main__":
    # Small, forward-consistent shapes.
    batch = 8
    n_input = 32
    n_enc_1, n_enc_2, n_enc_3 = 64, 32, 16
    n_dec_1, n_dec_2, n_dec_3 = 16, 32, 64
    n_z = 8

    key = jax.random.PRNGKey(0)
    key_x, key_p = jax.random.split(key)
    x = jax.random.normal(key_x, (batch, n_input), jnp.float32)
    params = init_ae_params(key_p, n_enc_1, n_enc_2, n_enc_3,
                            n_dec_1, n_dec_2, n_dec_3, n_input, n_z)

    outs = jax.jit(ae_forward)(params, x)
    outs = jax.block_until_ready(outs)

    x_bar, enc_h1, enc_h2, enc_h3, z = outs
    assert x_bar.shape == (batch, n_input)
    assert enc_h1.shape == (batch, n_enc_1)
    assert enc_h2.shape == (batch, n_enc_2)
    assert enc_h3.shape == (batch, n_enc_3)
    assert z.shape == (batch, n_z)

    # Sanity check against a plain-JAX reference of the same forward.
    def ref_forward(p, xx):
        h1 = jnp.maximum(xx @ p["enc_1"]["w"] + p["enc_1"]["b"], 0.0)
        h2 = jnp.maximum(h1 @ p["enc_2"]["w"] + p["enc_2"]["b"], 0.0)
        h3 = jnp.maximum(h2 @ p["enc_3"]["w"] + p["enc_3"]["b"], 0.0)
        zz = h3 @ p["z_layer"]["w"] + p["z_layer"]["b"]
        d1 = jnp.maximum(zz @ p["dec_1"]["w"] + p["dec_1"]["b"], 0.0)
        d2 = jnp.maximum(d1 @ p["dec_2"]["w"] + p["dec_2"]["b"], 0.0)
        d3 = jnp.maximum(d2 @ p["dec_3"]["w"] + p["dec_3"]["b"], 0.0)
        xb = d3 @ p["x_bar_layer"]["w"] + p["x_bar_layer"]["b"]
        return xb, h1, h2, h3, zz

    refs = ref_forward(params, x)
    for got, want in zip(outs, refs):
        assert jnp.allclose(got, want, atol=1e-5, rtol=1e-5)

    print("KERNEL_OK")
</pallas_src>

<mosaic_0001>
module attributes {stable_mosaic.version = 11 : i64} {
  func.func @_ae_fused_kernel(%arg0: i32, %arg1: memref<128x128xf32, #tpu.memory_space<vmem>>, %arg2: memref<128x128xf32, #tpu.memory_space<vmem>>, %arg3: memref<1x128xf32, #tpu.memory_space<vmem>>, %arg4: memref<128x128xf32, #tpu.memory_space<vmem>>, %arg5: memref<1x128xf32, #tpu.memory_space<vmem>>, %arg6: memref<128x128xf32, #tpu.memory_space<vmem>>, %arg7: memref<1x128xf32, #tpu.memory_space<vmem>>, %arg8: memref<128x128xf32, #tpu.memory_space<vmem>>, %arg9: memref<1x128xf32, #tpu.memory_space<vmem>>, %arg10: memref<128x128xf32, #tpu.memory_space<vmem>>, %arg11: memref<1x128xf32, #tpu.memory_space<vmem>>, %arg12: memref<128x128xf32, #tpu.memory_space<vmem>>, %arg13: memref<1x128xf32, #tpu.memory_space<vmem>>, %arg14: memref<128x128xf32, #tpu.memory_space<vmem>>, %arg15: memref<1x128xf32, #tpu.memory_space<vmem>>, %arg16: memref<128x128xf32, #tpu.memory_space<vmem>>, %arg17: memref<1x128xf32, #tpu.memory_space<vmem>>, %arg18: memref<128x128xf32, #tpu.memory_space<vmem>>, %arg19: memref<128x128xf32, #tpu.memory_space<vmem>>, %arg20: memref<128x128xf32, #tpu.memory_space<vmem>>, %arg21: memref<128x128xf32, #tpu.memory_space<vmem>>, %arg22: memref<128x128xf32, #tpu.memory_space<vmem>>) attributes {dimension_semantics = [#tpu.dimension_semantics<parallel>], iteration_bounds = array<i64: 1>, scalar_prefetch = 0 : i64, scratch_operands = 0 : i64, tpu.core_type = #tpu.core_type<tc>, window_params = [{transform_indices = @transform_0, window_bounds = array<i64: 128, 128>}, {pipeline_mode = #tpu.pipeline_mode<synchronous>, transform_indices = @transform_1, window_bounds = array<i64: 128, 128>}, {pipeline_mode = #tpu.pipeline_mode<synchronous>, transform_indices = @transform_2, window_bounds = array<i64: 1, 128>}, {pipeline_mode = #tpu.pipeline_mode<synchronous>, transform_indices = @transform_3, window_bounds = array<i64: 128, 128>}, {pipeline_mode = #tpu.pipeline_mode<synchronous>, transform_indices = @transform_4, window_bounds = array<i64: 1, 128>}, {pipeline_mode = #tpu.pipeline_mode<synchronous>, transform_indices = @transform_5, window_bounds = array<i64: 128, 128>}, {pipeline_mode = #tpu.pipeline_mode<synchronous>, transform_indices = @transform_6, window_bounds = array<i64: 1, 128>}, {pipeline_mode = #tpu.pipeline_mode<synchronous>, transform_indices = @transform_7, window_bounds = array<i64: 128, 128>}, {pipeline_mode = #tpu.pipeline_mode<synchronous>, transform_indices = @transform_8, window_bounds = array<i64: 1, 128>}, {pipeline_mode = #tpu.pipeline_mode<synchronous>, transform_indices = @transform_9, window_bounds = array<i64: 128, 128>}, {pipeline_mode = #tpu.pipeline_mode<synchronous>, transform_indices = @transform_10, window_bounds = array<i64: 1, 128>}, {pipeline_mode = #tpu.pipeline_mode<synchronous>, transform_indices = @transform_11, window_bounds = array<i64: 128, 128>}, {pipeline_mode = #tpu.pipeline_mode<synchronous>, transform_indices = @transform_12, window_bounds = array<i64: 1, 128>}, {pipeline_mode = #tpu.pipeline_mode<synchronous>, transform_indices = @transform_13, window_bounds = array<i64: 128, 128>}, {pipeline_mode = #tpu.pipeline_mode<synchronous>, transform_indices = @transform_14, window_bounds = array<i64: 1, 128>}, {pipeline_mode = #tpu.pipeline_mode<synchronous>, transform_indices = @transform_15, window_bounds = array<i64: 128, 128>}, {pipeline_mode = #tpu.pipeline_mode<synchronous>, transform_indices = @transform_16, window_bounds = array<i64: 1, 128>}, {transform_indices = @transform_17, window_bounds = array<i64: 128, 128>}, {transform_indices = @transform_18, window_bounds = array<i64: 128, 128>}, {transform_indices = @transform_19, window_bounds = array<i64: 128, 128>}, {transform_indices = @transform_20, window_bounds = array<i64: 128, 128>}, {transform_indices = @transform_21, window_bounds = array<i64: 128, 128>}]} {
    %c0 = arith.constant 0 : index
    %c0_0 = arith.constant 0 : index
    %0 = vector.load %arg1[%c0, %c0_0] : memref<128x128xf32, #tpu.memory_space<vmem>>, vector<128x128xf32>
    %c0_1 = arith.constant 0 : index
    %c0_2 = arith.constant 0 : index
    %1 = vector.load %arg2[%c0_1, %c0_2] : memref<128x128xf32, #tpu.memory_space<vmem>>, vector<128x128xf32>
    %cst = arith.constant dense<0.000000e+00> : vector<128x128xf32>
    %2 = tpu.matmul %0, %1, %cst {dimension_numbers = #tpu.dot_dimension_numbers<[1], [0], [0], [1], [0, 0, 1, 1], [], []>} : vector<128x128xf32>, vector<128x128xf32>, vector<128x128xf32> -> vector<128x128xf32>
    %c0_3 = arith.constant 0 : index
    %c0_4 = arith.constant 0 : index
    %3 = vector.load %arg3[%c0_3, %c0_4] : memref<1x128xf32, #tpu.memory_space<vmem>>, vector<1x128xf32>
    %4 = vector.broadcast %3 : vector<1x128xf32> to vector<128x128xf32>
    %5 = arith.addf %2, %4 : vector<128x128xf32>
    %cst_5 = arith.constant 0.000000e+00 : f32
    %6 = vector.broadcast %cst_5 : f32 to vector<128x128xf32>
    %7 = arith.maximumf %5, %6 : vector<128x128xf32>
    %c0_6 = arith.constant 0 : index
    %c0_7 = arith.constant 0 : index
    %8 = vector.load %arg4[%c0_6, %c0_7] : memref<128x128xf32, #tpu.memory_space<vmem>>, vector<128x128xf32>
    %cst_8 = arith.constant dense<0.000000e+00> : vector<128x128xf32>
    %9 = tpu.matmul %7, %8, %cst_8 {dimension_numbers = #tpu.dot_dimension_numbers<[1], [0], [0], [1], [0, 0, 1, 1], [], []>} : vector<128x128xf32>, vector<128x128xf32>, vector<128x128xf32> -> vector<128x128xf32>
    %c0_9 = arith.constant 0 : index
    %c0_10 = arith.constant 0 : index
    %10 = vector.load %arg5[%c0_9, %c0_10] : memref<1x128xf32, #tpu.memory_space<vmem>>, vector<1x128xf32>
    %11 = vector.broadcast %10 : vector<1x128xf32> to vector<128x128xf32>
    %12 = arith.addf %9, %11 : vector<128x128xf32>
    %cst_11 = arith.constant 0.000000e+00 : f32
    %13 = vector.broadcast %cst_11 : f32 to vector<128x128xf32>
    %14 = arith.maximumf %12, %13 : vector<128x128xf32>
    %c0_12 = arith.constant 0 : index
    %c0_13 = arith.constant 0 : index
    %15 = vector.load %arg6[%c0_12, %c0_13] : memref<128x128xf32, #tpu.memory_space<vmem>>, vector<128x128xf32>
    %cst_14 = arith.constant dense<0.000000e+00> : vector<128x128xf32>
    %16 = tpu.matmul %14, %15, %cst_14 {dimension_numbers = #tpu.dot_dimension_numbers<[1], [0], [0], [1], [0, 0, 1, 1], [], []>} : vector<128x128xf32>, vector<128x128xf32>, vector<128x128xf32> -> vector<128x128xf32>
    %c0_15 = arith.constant 0 : index
    %c0_16 = arith.constant 0 : index
    %17 = vector.load %arg7[%c0_15, %c0_16] : memref<1x128xf32, #tpu.memory_space<vmem>>, vector<1x128xf32>
    %18 = vector.broadcast %17 : vector<1x128xf32> to vector<128x128xf32>
    %19 = arith.addf %16, %18 : vector<128x128xf32>
    %cst_17 = arith.constant 0.000000e+00 : f32
    %20 = vector.broadcast %cst_17 : f32 to vector<128x128xf32>
    %21 = arith.maximumf %19, %20 : vector<128x128xf32>
    %c0_18 = arith.constant 0 : index
    %c0_19 = arith.constant 0 : index
    %22 = vector.load %arg8[%c0_18, %c0_19] : memref<128x128xf32, #tpu.memory_space<vmem>>, vector<128x128xf32>
    %cst_20 = arith.constant dense<0.000000e+00> : vector<128x128xf32>
    %23 = tpu.matmul %21, %22, %cst_20 {dimension_numbers = #tpu.dot_dimension_numbers<[1], [0], [0], [1], [0, 0, 1, 1], [], []>} : vector<128x128xf32>, vector<128x128xf32>, vector<128x128xf32> -> vector<128x128xf32>
    %c0_21 = arith.constant 0 : index
    %c0_22 = arith.constant 0 : index
    %24 = vector.load %arg9[%c0_21, %c0_22] : memref<1x128xf32, #tpu.memory_space<vmem>>, vector<1x128xf32>
    %25 = vector.broadcast %24 : vector<1x128xf32> to vector<128x128xf32>
    %26 = arith.addf %23, %25 : vector<128x128xf32>
    %c0_23 = arith.constant 0 : index
    %c0_24 = arith.constant 0 : index
    %27 = vector.load %arg10[%c0_23, %c0_24] : memref<128x128xf32, #tpu.memory_space<vmem>>, vector<128x128xf32>
    %cst_25 = arith.constant dense<0.000000e+00> : vector<128x128xf32>
    %28 = tpu.matmul %26, %27, %cst_25 {dimension_numbers = #tpu.dot_dimension_numbers<[1], [0], [0], [1], [0, 0, 1, 1], [], []>} : vector<128x128xf32>, vector<128x128xf32>, vector<128x128xf32> -> vector<128x128xf32>
    %c0_26 = arith.constant 0 : index
    %c0_27 = arith.constant 0 : index
    %29 = vector.load %arg11[%c0_26, %c0_27] : memref<1x128xf32, #tpu.memory_space<vmem>>, vector<1x128xf32>
    %30 = vector.broadcast %29 : vector<1x128xf32> to vector<128x128xf32>
    %31 = arith.addf %28, %30 : vector<128x128xf32>
    %cst_28 = arith.constant 0.000000e+00 : f32
    %32 = vector.broadcast %cst_28 : f32 to vector<128x128xf32>
    %33 = arith.maximumf %31, %32 : vector<128x128xf32>
    %c0_29 = arith.constant 0 : index
    %c0_30 = arith.constant 0 : index
    %34 = vector.load %arg12[%c0_29, %c0_30] : memref<128x128xf32, #tpu.memory_space<vmem>>, vector<128x128xf32>
    %cst_31 = arith.constant dense<0.000000e+00> : vector<128x128xf32>
    %35 = tpu.matmul %33, %34, %cst_31 {dimension_numbers = #tpu.dot_dimension_numbers<[1], [0], [0], [1], [0, 0, 1, 1], [], []>} : vector<128x128xf32>, vector<128x128xf32>, vector<128x128xf32> -> vector<128x128xf32>
    %c0_32 = arith.constant 0 : index
    %c0_33 = arith.constant 0 : index
    %36 = vector.load %arg13[%c0_32, %c0_33] : memref<1x128xf32, #tpu.memory_space<vmem>>, vector<1x128xf32>
    %37 = vector.broadcast %36 : vector<1x128xf32> to vector<128x128xf32>
    %38 = arith.addf %35, %37 : vector<128x128xf32>
    %cst_34 = arith.constant 0.000000e+00 : f32
    %39 = vector.broadcast %cst_34 : f32 to vector<128x128xf32>
    %40 = arith.maximumf %38, %39 : vector<128x128xf32>
    %c0_35 = arith.constant 0 : index
    %c0_36 = arith.constant 0 : index
    %41 = vector.load %arg14[%c0_35, %c0_36] : memref<128x128xf32, #tpu.memory_space<vmem>>, vector<128x128xf32>
    %cst_37 = arith.constant dense<0.000000e+00> : vector<128x128xf32>
    %42 = tpu.matmul %40, %41, %cst_37 {dimension_numbers = #tpu.dot_dimension_numbers<[1], [0], [0], [1], [0, 0, 1, 1], [], []>} : vector<128x128xf32>, vector<128x128xf32>, vector<128x128xf32> -> vector<128x128xf32>
    %c0_38 = arith.constant 0 : index
    %c0_39 = arith.constant 0 : index
    %43 = vector.load %arg15[%c0_38, %c0_39] : memref<1x128xf32, #tpu.memory_space<vmem>>, vector<1x128xf32>
    %44 = vector.broadcast %43 : vector<1x128xf32> to vector<128x128xf32>
    %45 = arith.addf %42, %44 : vector<128x128xf32>
    %cst_40 = arith.constant 0.000000e+00 : f32
    %46 = vector.broadcast %cst_40 : f32 to vector<128x128xf32>
    %47 = arith.maximumf %45, %46 : vector<128x128xf32>
    %c0_41 = arith.constant 0 : index
    %c0_42 = arith.constant 0 : index
    %48 = vector.load %arg16[%c0_41, %c0_42] : memref<128x128xf32, #tpu.memory_space<vmem>>, vector<128x128xf32>
    %cst_43 = arith.constant dense<0.000000e+00> : vector<128x128xf32>
    %49 = tpu.matmul %47, %48, %cst_43 {dimension_numbers = #tpu.dot_dimension_numbers<[1], [0], [0], [1], [0, 0, 1, 1], [], []>} : vector<128x128xf32>, vector<128x128xf32>, vector<128x128xf32> -> vector<128x128xf32>
    %c0_44 = arith.constant 0 : index
    %c0_45 = arith.constant 0 : index
    %50 = vector.load %arg17[%c0_44, %c0_45] : memref<1x128xf32, #tpu.memory_space<vmem>>, vector<1x128xf32>
    %51 = vector.broadcast %50 : vector<1x128xf32> to vector<128x128xf32>
    %52 = arith.addf %49, %51 : vector<128x128xf32>
    %c0_46 = arith.constant 0 : index
    %c0_47 = arith.constant 0 : index
    %53 = vector.load %arg18[%c0_46, %c0_47] : memref<128x128xf32, #tpu.memory_space<vmem>>, vector<128x128xf32>
    tpu.vector_store %arg18[%c0_46, %c0_47], %52 {strides = array<i32>} : memref<128x128xf32, #tpu.memory_space<vmem>>, vector<128x128xf32>,
    %c0_48 = arith.constant 0 : index
    %c0_49 = arith.constant 0 : index
    %54 = vector.load %arg19[%c0_48, %c0_49] : memref<128x128xf32, #tpu.memory_space<vmem>>, vector<128x128xf32>
    tpu.vector_store %arg19[%c0_48, %c0_49], %7 {strides = array<i32>} : memref<128x128xf32, #tpu.memory_space<vmem>>, vector<128x128xf32>,
    %c0_50 = arith.constant 0 : index
    %c0_51 = arith.constant 0 : index
    %55 = vector.load %arg20[%c0_50, %c0_51] : memref<128x128xf32, #tpu.memory_space<vmem>>, vector<128x128xf32>
    tpu.vector_store %arg20[%c0_50, %c0_51], %14 {strides = array<i32>} : memref<128x128xf32, #tpu.memory_space<vmem>>, vector<128x128xf32>,
    %c0_52 = arith.constant 0 : index
    %c0_53 = arith.constant 0 : index
    %56 = vector.load %arg21[%c0_52, %c0_53] : memref<128x128xf32, #tpu.memory_space<vmem>>, vector<128x128xf32>
    tpu.vector_store %arg21[%c0_52, %c0_53], %21 {strides = array<i32>} : memref<128x128xf32, #tpu.memory_space<vmem>>, vector<128x128xf32>,
    %c0_54 = arith.constant 0 : index
    %c0_55 = arith.constant 0 : index
    %57 = vector.load %arg22[%c0_54, %c0_55] : memref<128x128xf32, #tpu.memory_space<vmem>>, vector<128x128xf32>
    tpu.vector_store %arg22[%c0_54, %c0_55], %26 {strides = array<i32>} : memref<128x128xf32, #tpu.memory_space<vmem>>, vector<128x128xf32>,
    return
  }
  func.func @transform_0(%arg0: i32) -> (i32, i32) {
    %c0_i32 = arith.constant 0 : i32
    %c0_i32_0 = arith.constant 0 : i32
    return %arg0, %c0_i32 : i32, i32
  }
  func.func @transform_1(%arg0: i32) -> (i32, i32) {
    %c0_i32 = arith.constant 0 : i32
    %c0_i32_0 = arith.constant 0 : i32
    %c0_i32_1 = arith.constant 0 : i32
    return %c0_i32, %c0_i32_0 : i32, i32
  }
  func.func @transform_2(%arg0: i32) -> (i32, i32) {
    %c0_i32 = arith.constant 0 : i32
    %c0_i32_0 = arith.constant 0 : i32
    %c0_i32_1 = arith.constant 0 : i32
    return %c0_i32, %c0_i32_0 : i32, i32
  }
  func.func @transform_3(%arg0: i32) -> (i32, i32) {
    %c0_i32 = arith.constant 0 : i32
    %c0_i32_0 = arith.constant 0 : i32
    %c0_i32_1 = arith.constant 0 : i32
    return %c0_i32, %c0_i32_0 : i32, i32
  }
  func.func @transform_4(%arg0: i32) -> (i32, i32) {
    %c0_i32 = arith.constant 0 : i32
    %c0_i32_0 = arith.constant 0 : i32
    %c0_i32_1 = arith.constant 0 : i32
    return %c0_i32, %c0_i32_0 : i32, i32
  }
  func.func @transform_5(%arg0: i32) -> (i32, i32) {
    %c0_i32 = arith.constant 0 : i32
    %c0_i32_0 = arith.constant 0 : i32
    %c0_i32_1 = arith.constant 0 : i32
    return %c0_i32, %c0_i32_0 : i32, i32
  }
  func.func @transform_6(%arg0: i32) -> (i32, i32) {
    %c0_i32 = arith.constant 0 : i32
    %c0_i32_0 = arith.constant 0 : i32
    %c0_i32_1 = arith.constant 0 : i32
    return %c0_i32, %c0_i32_0 : i32, i32
  }
  func.func @transform_7(%arg0: i32) -> (i32, i32) {
    %c0_i32 = arith.constant 0 : i32
    %c0_i32_0 = arith.constant 0 : i32
    %c0_i32_1 = arith.constant 0 : i32
    return %c0_i32, %c0_i32_0 : i32, i32
  }
  func.func @transform_8(%arg0: i32) -> (i32, i32) {
    %c0_i32 = arith.constant 0 : i32
    %c0_i32_0 = arith.constant 0 : i32
    %c0_i32_1 = arith.constant 0 : i32
    return %c0_i32, %c0_i32_0 : i32, i32
  }
  func.func @transform_9(%arg0: i32) -> (i32, i32) {
    %c0_i32 = arith.constant 0 : i32
    %c0_i32_0 = arith.constant 0 : i32
    %c0_i32_1 = arith.constant 0 : i32
    return %c0_i32, %c0_i32_0 : i32, i32
  }
  func.func @transform_10(%arg0: i32) -> (i32, i32) {
    %c0_i32 = arith.constant 0 : i32
    %c0_i32_0 = arith.constant 0 : i32
    %c0_i32_1 = arith.constant 0 : i32
    return %c0_i32, %c0_i32_0 : i32, i32
  }
  func.func @transform_11(%arg0: i32) -> (i32, i32) {
    %c0_i32 = arith.constant 0 : i32
    %c0_i32_0 = arith.constant 0 : i32
    %c0_i32_1 = arith.constant 0 : i32
    return %c0_i32, %c0_i32_0 : i32, i32
  }
  func.func @transform_12(%arg0: i32) -> (i32, i32) {
    %c0_i32 = arith.constant 0 : i32
    %c0_i32_0 = arith.constant 0 : i32
    %c0_i32_1 = arith.constant 0 : i32
    return %c0_i32, %c0_i32_0 : i32, i32
  }
  func.func @transform_13(%arg0: i32) -> (i32, i32) {
    %c0_i32 = arith.constant 0 : i32
    %c0_i32_0 = arith.constant 0 : i32
    %c0_i32_1 = arith.constant 0 : i32
    return %c0_i32, %c0_i32_0 : i32, i32
  }
  func.func @transform_14(%arg0: i32) -> (i32, i32) {
    %c0_i32 = arith.constant 0 : i32
    %c0_i32_0 = arith.constant 0 : i32
    %c0_i32_1 = arith.constant 0 : i32
    return %c0_i32, %c0_i32_0 : i32, i32
  }
  func.func @transform_15(%arg0: i32) -> (i32, i32) {
    %c0_i32 = arith.constant 0 : i32
    %c0_i32_0 = arith.constant 0 : i32
    %c0_i32_1 = arith.constant 0 : i32
    return %c0_i32, %c0_i32_0 : i32, i32
  }
  func.func @transform_16(%arg0: i32) -> (i32, i32) {
    %c0_i32 = arith.constant 0 : i32
    %c0_i32_0 = arith.constant 0 : i32
    %c0_i32_1 = arith.constant 0 : i32
    return %c0_i32, %c0_i32_0 : i32, i32
  }
  func.func @transform_17(%arg0: i32) -> (i32, i32) {
    %c0_i32 = arith.constant 0 : i32
    %c0_i32_0 = arith.constant 0 : i32
    return %arg0, %c0_i32 : i32, i32
  }
  func.func @transform_18(%arg0: i32) -> (i32, i32) {
    %c0_i32 = arith.constant 0 : i32
    %c0_i32_0 = arith.constant 0 : i32
    return %arg0, %c0_i32 : i32, i32
  }
  func.func @transform_19(%arg0: i32) -> (i32, i32) {
    %c0_i32 = arith.constant 0 : i32
    %c0_i32_0 = arith.constant 0 : i32
    return %arg0, %c0_i32 : i32, i32
  }
  func.func @transform_20(%arg0: i32) -> (i32, i32) {
    %c0_i32 = arith.constant 0 : i32
    %c0_i32_0 = arith.constant 0 : i32
    return %arg0, %c0_i32 : i32, i32
  }
  func.func @transform_21(%arg0: i32) -> (i32, i32) {
    %c0_i32 = arith.constant 0 : i32
    %c0_i32_0 = arith.constant 0 : i32
    return %arg0, %c0_i32 : i32, i32
  }
}

</mosaic_0001>

<llo_original>
// kernel: ae_forward.1
$region0: #{ae_forward.1}
  #allocation0 [shape = 'u32[]', space=smem, size = 0x4, offset = 0x4, fixed_abs, tag = 'smem constant byte address 0x4 - core index']
  #allocation1 [shape = 'u32[144,128]{1,0:T(1,128)}', space=vmem, size = 0x12000, scoped, tag = 'internal scratch']
  %s0 = inlined_call_operand.vmem [shape: f32[128,128], index: 0, kind: input, shape index: {}]
  %s1 = inlined_call_operand.vmem [shape: f32[128,128], index: 1, kind: input, shape index: {}]
  %s2 = inlined_call_operand.vmem [shape: f32[1,128], index: 2, kind: input, shape index: {}]
  %s3 = inlined_call_operand.vmem [shape: f32[128,128], index: 3, kind: input, shape index: {}]
  %s4 = inlined_call_operand.vmem [shape: f32[1,128], index: 4, kind: input, shape index: {}]
  %s5 = inlined_call_operand.vmem [shape: f32[128,128], index: 5, kind: input, shape index: {}]
  %s6 = inlined_call_operand.vmem [shape: f32[1,128], index: 6, kind: input, shape index: {}]
  %s7 = inlined_call_operand.vmem [shape: f32[128,128], index: 7, kind: input, shape index: {}]
  %s8 = inlined_call_operand.vmem [shape: f32[1,128], index: 8, kind: input, shape index: {}]
  %s9 = inlined_call_operand.vmem [shape: f32[128,128], index: 9, kind: input, shape index: {}]
  %s10 = inlined_call_operand.vmem [shape: f32[1,128], index: 10, kind: input, shape index: {}]
  %s11 = inlined_call_operand.vmem [shape: f32[128,128], index: 11, kind: input, shape index: {}]
  %s12 = inlined_call_operand.vmem [shape: f32[1,128], index: 12, kind: input, shape index: {}]
  %s13 = inlined_call_operand.vmem [shape: f32[128,128], index: 13, kind: input, shape index: {}]
  %s14 = inlined_call_operand.vmem [shape: f32[1,128], index: 14, kind: input, shape index: {}]
  %s15 = inlined_call_operand.vmem [shape: f32[128,128], index: 15, kind: input, shape index: {}]
  %s16 = inlined_call_operand.vmem [shape: f32[1,128], index: 16, kind: input, shape index: {}]
  %s17 = inlined_call_operand.vmem [shape: f32[128,128], index: 17, kind: output, shape index: {0}]
  %s18 = inlined_call_operand.vmem [shape: f32[128,128], index: 18, kind: output, shape index: {1}]
  %s19 = inlined_call_operand.vmem [shape: f32[128,128], index: 19, kind: output, shape index: {2}]
  %s20 = inlined_call_operand.vmem [shape: f32[128,128], index: 20, kind: output, shape index: {3}]
  %s21 = inlined_call_operand.vmem [shape: f32[128,128], index: 21, kind: output, shape index: {4}]
  %22 = xla_tuple %s17, %s18, %s19, %s20, %s21
  %s23 = sld [smem:[#allocation0]]
  $region110: #{ae_forward.1} parent=0
    _
  %s25 = ssub.s32 1, %s23
  %s26 = scalar_select 0, %s25, %s23
  // Predicated region
  $region2: #{ae_forward.1} parent=0 // pred_check
    _
  $region3: #{ae_forward.1} parent=0 // pred_check_branch
    %28 = sbr.rel (0) target = $region5
  $region4: #{ae_forward.1} parent=0 // pred_region
    _
  $region5: #{ae_forward.1} parent=0 // pred_fallthru
    _
  // Predicated region
  $region6: #{ae_forward.1} parent=0 // pred_check
    _
  $region7: #{ae_forward.1} parent=0 // pred_check_branch
    %30 = sbr.rel (0) target = $region9
  $region8: #{ae_forward.1} parent=0 // pred_region
    _
  $region9: #{ae_forward.1} parent=0 // pred_fallthru
    _
  // Predicated region
  $region10: #{ae_forward.1} parent=0 // pred_check
    _
  $region11: #{ae_forward.1} parent=0 // pred_check_branch
    %32 = sbr.rel (0) target = $region13
  $region12: #{ae_forward.1} parent=0 // pred_region
    _
  $region13: #{ae_forward.1} parent=0 // pred_fallthru
    _
  // Predicated region
  $region14: #{ae_forward.1} parent=0 // pred_check
    _
  $region15: #{ae_forward.1} parent=0 // pred_check_branch
    %34 = sbr.rel (0) target = $region17
  $region16: #{ae_forward.1} parent=0 // pred_region
    _
  $region17: #{ae_forward.1} parent=0 // pred_fallthru
    _
  // Predicated region
  $region18: #{ae_forward.1} parent=0 // pred_check
    _
  $region19: #{ae_forward.1} parent=0 // pred_check_branch
    %36 = sbr.rel (0) target = $region21
  $region20: #{ae_forward.1} parent=0 // pred_region
    _
  $region21: #{ae_forward.1} parent=0 // pred_fallthru
    _
  // Predicated region
  $region22: #{ae_forward.1} parent=0 // pred_check
    _
  $region23: #{ae_forward.1} parent=0 // pred_check_branch
    %38 = sbr.rel (0) target = $region25
  $region24: #{ae_forward.1} parent=0 // pred_region
    _
  $region25: #{ae_forward.1} parent=0 // pred_fallthru
    _
  // Predicated region
  $region26: #{ae_forward.1} parent=0 // pred_check
    _
  $region27: #{ae_forward.1} parent=0 // pred_check_branch
    %40 = sbr.rel (0) target = $region29
  $region28: #{ae_forward.1} parent=0 // pred_region
    _
  $region29: #{ae_forward.1} parent=0 // pred_fallthru
    _
  // Predicated region
  $region30: #{ae_forward.1} parent=0 // pred_check
    _
  $region31: #{ae_forward.1} parent=0 // pred_check_branch
    %42 = sbr.rel (0) target = $region33
  $region32: #{ae_forward.1} parent=0 // pred_region
    _
  $region33: #{ae_forward.1} parent=0 // pred_fallthru
    _
  // Predicated region
  $region34: #{ae_forward.1} parent=0 // pred_check
    _
  $region35: #{ae_forward.1} parent=0 // pred_check_branch
    %44 = sbr.rel (0) target = $region37
  $region36: #{ae_forward.1} parent=0 // pred_region
    _
  $region37: #{ae_forward.1} parent=0 // pred_fallthru
    _
  // Predicated region
  $region38: #{ae_forward.1} parent=0 // pred_check
    _
  $region39: #{ae_forward.1} parent=0 // pred_check_branch
    %46 = sbr.rel (0) target = $region41
  $region40: #{ae_forward.1} parent=0 // pred_region
    _
  $region41: #{ae_forward.1} parent=0 // pred_fallthru
    _
  // Predicated region
  $region42: #{ae_forward.1} parent=0 // pred_check
    _
  $region43: #{ae_forward.1} parent=0 // pred_check_branch
    %48 = sbr.rel (0) target = $region45
  $region44: #{ae_forward.1} parent=0 // pred_region
    _
  $region45: #{ae_forward.1} parent=0 // pred_fallthru
    _
  // Predicated region
  $region46: #{ae_forward.1} parent=0 // pred_check
    _
  $region47: #{ae_forward.1} parent=0 // pred_check_branch
    %50 = sbr.rel (0) target = $region49
  $region48: #{ae_forward.1} parent=0 // pred_region
    _
  $region49: #{ae_forward.1} parent=0 // pred_fallthru
    _
  // Predicated region
  $region50: #{ae_forward.1} parent=0 // pred_check
    _
  $region51: #{ae_forward.1} parent=0 // pred_check_branch
    %52 = sbr.rel (0) target = $region53
  $region52: #{ae_forward.1} parent=0 // pred_region
    _
  $region53: #{ae_forward.1} parent=0 // pred_fallthru
    _
  // Predicated region
  $region54: #{ae_forward.1} parent=0 // pred_check
    _
  $region55: #{ae_forward.1} parent=0 // pred_check_branch
    %54 = sbr.rel (0) target = $region57
  $region56: #{ae_forward.1} parent=0 // pred_region
    _
  $region57: #{ae_forward.1} parent=0 // pred_fallthru
    _
  // Predicated region
  $region58: #{ae_forward.1} parent=0 // pred_check
    _
  $region59: #{ae_forward.1} parent=0 // pred_check_branch
    %56 = sbr.rel (0) target = $region61
  $region60: #{ae_forward.1} parent=0 // pred_region
    _
  $region61: #{ae_forward.1} parent=0 // pred_fallthru
    _
  // Predicated region
  $region62: #{ae_forward.1} parent=0 // pred_check
    _
  $region63: #{ae_forward.1} parent=0 // pred_check_branch
    %58 = sbr.rel (0) target = $region65
  $region64: #{ae_forward.1} parent=0 // pred_region
    _
  $region65: #{ae_forward.1} parent=0 // pred_fallthru
    _
  // Predicated region
  $region66: #{ae_forward.1} parent=0 // pred_check
    _
  $region67: #{ae_forward.1} parent=0 // pred_check_branch
    %60 = sbr.rel (0) target = $region69
  $region68: #{ae_forward.1} parent=0 // pred_region
    _
  $region69: #{ae_forward.1} parent=0 // pred_fallthru
    _
  %v61 = vld [vmem:[%s0] sm:$0xff]
  %v62 = vld [vmem:[%s0 + $0x8] sm:$0xff]
  %v63 = vld [vmem:[%s0 + $0x10] sm:$0xff]
  %v64 = vld [vmem:[%s0 + $0x18] sm:$0xff]
  %v65 = vld [vmem:[%s0 + $0x20] sm:$0xff]
  %v66 = vld [vmem:[%s0 + $0x28] sm:$0xff]
  %v67 = vld [vmem:[%s0 + $0x30] sm:$0xff]
  %v68 = vld [vmem:[%s0 + $0x38] sm:$0xff]
  %v69 = vld [vmem:[%s0 + $0x40] sm:$0xff]
  %v70 = vld [vmem:[%s0 + $0x48] sm:$0xff]
  %v71 = vld [vmem:[%s0 + $0x50] sm:$0xff]
  %v72 = vld [vmem:[%s0 + $0x58] sm:$0xff]
  %v73 = vld [vmem:[%s0 + $0x60] sm:$0xff]
  %v74 = vld [vmem:[%s0 + $0x68] sm:$0xff]
  %v75 = vld [vmem:[%s0 + $0x70] sm:$0xff]
  %v76 = vld [vmem:[%s0 + $0x78] sm:$0xff]
  %v77 = vld [vmem:[%s1] sm:$0xff]
  %v78 = vld [vmem:[%s1 + $0x8] sm:$0xff]
  %v79 = vld [vmem:[%s1 + $0x10] sm:$0xff]
  %v80 = vld [vmem:[%s1 + $0x18] sm:$0xff]
  %v81 = vld [vmem:[%s1 + $0x20] sm:$0xff]
  %v82 = vld [vmem:[%s1 + $0x28] sm:$0xff]
  %v83 = vld [vmem:[%s1 + $0x30] sm:$0xff]
  %v84 = vld [vmem:[%s1 + $0x38] sm:$0xff]
  %v85 = vld [vmem:[%s1 + $0x40] sm:$0xff]
  %v86 = vld [vmem:[%s1 + $0x48] sm:$0xff]
  %v87 = vld [vmem:[%s1 + $0x50] sm:$0xff]
  %v88 = vld [vmem:[%s1 + $0x58] sm:$0xff]
  %v89 = vld [vmem:[%s1 + $0x60] sm:$0xff]
  %v90 = vld [vmem:[%s1 + $0x68] sm:$0xff]
  %v91 = vld [vmem:[%s1 + $0x70] sm:$0xff]
  %v92 = vld [vmem:[%s1 + $0x78] sm:$0xff]
  %v93 = vld [vmem:[%s2] sm:$0x1]
  %v95 = vlaneseq
  %v96 = vshrl.u32 %v95, 7
  %v97 = vsub.s32 0, %v96
  %v98 = vrot.slane %v93, %v97
  %100 = vmatprep.subr.mxu0 0.0
  %101 = vmatpush1.msra.mxu0 %v92
  %102 = vmatprep.subr.mxu0 0.0
  %103 = vmatpush1.msra.mxu0 %v91
  %104 = vmatprep.subr.mxu0 0.0
  %105 = vmatpush1.msra.mxu0 %v90
  %106 = vmatprep.subr.mxu0 0.0
  %107 = vmatpush1.msra.mxu0 %v89
  %108 = vmatprep.subr.mxu0 0.0
  %109 = vmatpush1.msra.mxu0 %v88
  %110 = vmatprep.subr.mxu0 0.0
  %111 = vmatpush1.msra.mxu0 %v87
  %112 = vmatprep.subr.mxu0 0.0
  %113 = vmatpush1.msra.mxu0 %v86
  %114 = vmatprep.subr.mxu0 0.0
  %115 = vmatpush1.msra.mxu0 %v85
  %116 = vmatprep.subr.mxu0 0.0
  %117 = vmatpush1.msra.mxu0 %v84
  %118 = vmatprep.subr.mxu0 0.0
  %119 = vmatpush1.msra.mxu0 %v83
  %120 = vmatprep.subr.mxu0 0.0
  %121 = vmatpush1.msra.mxu0 %v82
  %122 = vmatprep.subr.mxu0 0.0
  %123 = vmatpush1.msra.mxu0 %v81
  %124 = vmatprep.subr.mxu0 0.0
  %125 = vmatpush1.msra.mxu0 %v80
  %126 = vmatprep.subr.mxu0 0.0
  %127 = vmatpush1.msra.mxu0 %v79
  %128 = vmatprep.subr.mxu0 0.0
  %129 = vmatpush1.msra.mxu0 %v78
  %130 = vmatprep.subr.mxu0 0.0
  %131 = vmatpush1.msra.mxu0 %v77
  %132 = vmatprep.subr.mxu0 0.0
  %133 = vmatpush2.msra.mxu0 0.0
  %134 = vmatprep.subr.mxu0 0.0
  %135 = vmatpush2.msra.mxu0 0.0
  %136 = vmatprep.subr.mxu0 0.0
  %137 = vmatpush2.msra.mxu0 0.0
  %138 = vmatprep.subr.mxu0 0.0
  %139 = vmatpush2.msra.mxu0 0.0
  %140 = vmatprep.subr.mxu0 0.0
  %141 = vmatpush2.msra.mxu0 0.0
  %142 = vmatprep.subr.mxu0 0.0
  %143 = vmatpush2.msra.mxu0 0.0
  %144 = vmatprep.subr.mxu0 0.0
  %145 = vmatpush2.msra.mxu0 0.0
  %146 = vmatprep.subr.mxu0 0.0
  %147 = vmatpush2.msra.mxu0 0.0
  %148 = vmatprep.subr.mxu0 0.0
  %149 = vmatpush2.msra.mxu0 0.0
  %150 = vmatprep.subr.mxu0 0.0
  %151 = vmatpush2.msra.mxu0 0.0
  %152 = vmatprep.subr.mxu0 0.0
  %153 = vmatpush2.msra.mxu0 0.0
  %154 = vmatprep.subr.mxu0 0.0
  %155 = vmatpush2.msra.mxu0 0.0
  %156 = vmatprep.subr.mxu0 0.0
  %157 = vmatpush2.msra.mxu0 0.0
  %158 = vmatprep.subr.mxu0 0.0
  %159 = vmatpush2.msra.mxu0 0.0
  %160 = vmatprep.subr.mxu0 0.0
  %161 = vmatpush2.msra.mxu0 0.0
  %162 = vmatprep.subr.mxu0 0.0
  %163 = vmatpush2.msra.mxu0 0.0
  %164 = vmatprep.mubr.f32.mxu0 0.0
  %165 = vmatmul.mubr.f32.gmra.mxu0 %v61
  %v166 = vpop.f32.mrf.mxu0
  %v167 = vadd.f32 %v98, %v166
  %v168 = vpop.f32.mrf.mxu0
  %169 = vmatprep.mubr.f32.mxu0 0.0
  %170 = vmatmul.mubr.f32.gmra.mxu0 %v62
  %v171 = vpop.f32.mrf.mxu0
  %v172 = vadd.f32 %v98, %v171
  %v173 = vpop.f32.mrf.mxu0
  %174 = vmatprep.mubr.f32.mxu0 0.0
  %175 = vmatmul.mubr.f32.gmra.mxu0 %v63
  %v176 = vpop.f32.mrf.mxu0
  %v177 = vadd.f32 %v98, %v176
  %v178 = vpop.f32.mrf.mxu0
  %179 = vmatprep.mubr.f32.mxu0 0.0
  %180 = vmatmul.mubr.f32.gmra.mxu0 %v64
  %v181 = vpop.f32.mrf.mxu0
  %v182 = vadd.f32 %v98, %v181
  %v183 = vpop.f32.mrf.mxu0
  %184 = vmatprep.mubr.f32.mxu0 0.0
  %185 = vmatmul.mubr.f32.gmra.mxu0 %v65
  %v186 = vpop.f32.mrf.mxu0
  %v187 = vadd.f32 %v98, %v186
  %v188 = vpop.f32.mrf.mxu0
  %189 = vmatprep.mubr.f32.mxu0 0.0
  %190 = vmatmul.mubr.f32.gmra.mxu0 %v66
  %v191 = vpop.f32.mrf.mxu0
  %v192 = vadd.f32 %v98, %v191
  %v193 = vpop.f32.mrf.mxu0
  %194 = vmatprep.mubr.f32.mxu0 0.0
  %195 = vmatmul.mubr.f32.gmra.mxu0 %v67
  %v196 = vpop.f32.mrf.mxu0
  %v197 = vadd.f32 %v98, %v196
  %v198 = vpop.f32.mrf.mxu0
  %199 = vmatprep.mubr.f32.mxu0 0.0
  %200 = vmatmul.mubr.f32.gmra.mxu0 %v68
  %v201 = vpop.f32.mrf.mxu0
  %v202 = vadd.f32 %v98, %v201
  %v203 = vpop.f32.mrf.mxu0
  %204 = vmatprep.mubr.f32.mxu0 0.0
  %205 = vmatmul.mubr.f32.gmra.mxu0 %v69
  %v206 = vpop.f32.mrf.mxu0
  %v207 = vadd.f32 %v98, %v206
  %v208 = vpop.f32.mrf.mxu0
  %209 = vmatprep.mubr.f32.mxu0 0.0
  %210 = vmatmul.mubr.f32.gmra.mxu0 %v70
  %v211 = vpop.f32.mrf.mxu0
  %v212 = vadd.f32 %v98, %v211
  %v213 = vpop.f32.mrf.mxu0
  %214 = vmatprep.mubr.f32.mxu0 0.0
  %215 = vmatmul.mubr.f32.gmra.mxu0 %v71
  %v216 = vpop.f32.mrf.mxu0
  %v217 = vadd.f32 %v98, %v216
  %v218 = vpop.f32.mrf.mxu0
  %219 = vmatprep.mubr.f32.mxu0 0.0
  %220 = vmatmul.mubr.f32.gmra.mxu0 %v72
  %v221 = vpop.f32.mrf.mxu0
  %v222 = vadd.f32 %v98, %v221
  %v223 = vpop.f32.mrf.mxu0
  %224 = vmatprep.mubr.f32.mxu0 0.0
  %225 = vmatmul.mubr.f32.gmra.mxu0 %v73
  %v226 = vpop.f32.mrf.mxu0
  %v227 = vadd.f32 %v98, %v226
  %v228 = vpop.f32.mrf.mxu0
  %229 = vmatprep.mubr.f32.mxu0 0.0
  %230 = vmatmul.mubr.f32.gmra.mxu0 %v74
  %v231 = vpop.f32.mrf.mxu0
  %v232 = vadd.f32 %v98, %v231
  %v233 = vpop.f32.mrf.mxu0
  %234 = vmatprep.mubr.f32.mxu0 0.0
  %235 = vmatmul.mubr.f32.gmra.mxu0 %v75
  %v236 = vpop.f32.mrf.mxu0
  %v237 = vadd.f32 %v98, %v236
  %v238 = vpop.f32.mrf.mxu0
  %239 = vmatprep.mubr.f32.mxu0 0.0
  %240 = vmatmul.mubr.f32.gmra.mxu0 %v76
  %v241 = vpop.f32.mrf.mxu0
  %v242 = vadd.f32 %v98, %v241
  %v243 = vpop.f32.mrf.mxu0
  %244 = vdwg.mxu0
  %v245 = vmax.f32 %v167, 0.0
  %v246 = vmax.f32 %v172, 0.0
  %v247 = vmax.f32 %v177, 0.0
  %v248 = vmax.f32 %v182, 0.0
  %v249 = vmax.f32 %v187, 0.0
  %v250 = vmax.f32 %v192, 0.0
  %v251 = vmax.f32 %v197, 0.0
  %v252 = vmax.f32 %v202, 0.0
  %v253 = vmax.f32 %v207, 0.0
  %v254 = vmax.f32 %v212, 0.0
  %v255 = vmax.f32 %v217, 0.0
  %v256 = vmax.f32 %v222, 0.0
  %v257 = vmax.f32 %v227, 0.0
  %v258 = vmax.f32 %v232, 0.0
  %v259 = vmax.f32 %v237, 0.0
  %v260 = vmax.f32 %v242, 0.0
  %v261 = vld [vmem:[%s3] sm:$0xff]
  %v262 = vld [vmem:[%s3 + $0x8] sm:$0xff]
  %v263 = vld [vmem:[%s3 + $0x10] sm:$0xff]
  %v264 = vld [vmem:[%s3 + $0x18] sm:$0xff]
  %v265 = vld [vmem:[%s3 + $0x20] sm:$0xff]
  %v266 = vld [vmem:[%s3 + $0x28] sm:$0xff]
  %v267 = vld [vmem:[%s3 + $0x30] sm:$0xff]
  %v268 = vld [vmem:[%s3 + $0x38] sm:$0xff]
  %v269 = vld [vmem:[%s3 + $0x40] sm:$0xff]
  %v270 = vld [vmem:[%s3 + $0x48] sm:$0xff]
  %v271 = vld [vmem:[%s3 + $0x50] sm:$0xff]
  %v272 = vld [vmem:[%s3 + $0x58] sm:$0xff]
  %v273 = vld [vmem:[%s3 + $0x60] sm:$0xff]
  %v274 = vld [vmem:[%s3 + $0x68] sm:$0xff]
  %v275 = vld [vmem:[%s3 + $0x70] sm:$0xff]
  %v276 = vld [vmem:[%s3 + $0x78] sm:$0xff]
  %v277 = vld [vmem:[%s4] sm:$0x1]
  %v279 = vlaneseq
  %v280 = vshrl.u32 %v279, 7
  %v281 = vsub.s32 0, %v280
  %v282 = vrot.slane %v277, %v281
  %284 = vmatprep.subr.mxu0 0.0
  %285 = vmatpush1.msra.mxu0 %v276
  %286 = vmatprep.subr.mxu0 0.0
  %287 = vmatpush1.msra.mxu0 %v275
  %288 = vmatprep.subr.mxu0 0.0
  %289 = vmatpush1.msra.mxu0 %v274
  %290 = vmatprep.subr.mxu0 0.0
  %291 = vmatpush1.msra.mxu0 %v273
  %292 = vmatprep.subr.mxu0 0.0
  %293 = vmatpush1.msra.mxu0 %v272
  %294 = vmatprep.subr.mxu0 0.0
  %295 = vmatpush1.msra.mxu0 %v271
  %296 = vmatprep.subr.mxu0 0.0
  %297 = vmatpush1.msra.mxu0 %v270
  %298 = vmatprep.subr.mxu0 0.0
  %299 = vmatpush1.msra.mxu0 %v269
  %300 = vmatprep.subr.mxu0 0.0
  %301 = vmatpush1.msra.mxu0 %v268
  %302 = vmatprep.subr.mxu0 0.0
  %303 = vmatpush1.msra.mxu0 %v267
  %304 = vmatprep.subr.mxu0 0.0
  %305 = vmatpush1.msra.mxu0 %v266
  %306 = vmatprep.subr.mxu0 0.0
  %307 = vmatpush1.msra.mxu0 %v265
  %308 = vmatprep.subr.mxu0 0.0
  %309 = vmatpush1.msra.mxu0 %v264
  %310 = vmatprep.subr.mxu0 0.0
  %311 = vmatpush1.msra.mxu0 %v263
  %312 = vmatprep.subr.mxu0 0.0
  %313 = vmatpush1.msra.mxu0 %v262
  %314 = vmatprep.subr.mxu0 0.0
  %315 = vmatpush1.msra.mxu0 %v261
  %316 = vmatprep.subr.mxu0 0.0
  %317 = vmatpush2.msra.mxu0 0.0
  %318 = vmatprep.subr.mxu0 0.0
  %319 = vmatpush2.msra.mxu0 0.0
  %320 = vmatprep.subr.mxu0 0.0
  %321 = vmatpush2.msra.mxu0 0.0
  %322 = vmatprep.subr.mxu0 0.0
  %323 = vmatpush2.msra.mxu0 0.0
  %324 = vmatprep.subr.mxu0 0.0
  %325 = vmatpush2.msra.mxu0 0.0
  %326 = vmatprep.subr.mxu0 0.0
  %327 = vmatpush2.msra.mxu0 0.0
  %328 = vmatprep.subr.mxu0 0.0
  %329 = vmatpush2.msra.mxu0 0.0
  %330 = vmatprep.subr.mxu0 0.0
  %331 = vmatpush2.msra.mxu0 0.0
  %332 = vmatprep.subr.mxu0 0.0
  %333 = vmatpush2.msra.mxu0 0.0
  %334 = vmatprep.subr.mxu0 0.0
  %335 = vmatpush2.msra.mxu0 0.0
  %336 = vmatprep.subr.mxu0 0.0
  %337 = vmatpush2.msra.mxu0 0.0
  %338 = vmatprep.subr.mxu0 0.0
  %339 = vmatpush2.msra.mxu0 0.0
  %340 = vmatprep.subr.mxu0 0.0
  %341 = vmatpush2.msra.mxu0 0.0
  %342 = vmatprep.subr.mxu0 0.0
  %343 = vmatpush2.msra.mxu0 0.0
  %344 = vmatprep.subr.mxu0 0.0
  %345 = vmatpush2.msra.mxu0 0.0
  %346 = vmatprep.subr.mxu0 0.0
  %347 = vmatpush2.msra.mxu0 0.0
  %348 = vmatprep.mubr.f32.mxu0 0.0
  %349 = vmatmul.mubr.f32.gmra.mxu0 %v245
  %v350 = vpop.f32.mrf.mxu0
  %v351 = vadd.f32 %v282, %v350
  %v352 = vpop.f32.mrf.mxu0
  %353 = vmatprep.mubr.f32.mxu0 0.0
  %354 = vmatmul.mubr.f32.gmra.mxu0 %v246
  %v355 = vpop.f32.mrf.mxu0
  %v356 = vadd.f32 %v282, %v355
  %v357 = vpop.f32.mrf.mxu0
  %358 = vmatprep.mubr.f32.mxu0 0.0
  %359 = vmatmul.mubr.f32.gmra.mxu0 %v247
  %v360 = vpop.f32.mrf.mxu0
  %v361 = vadd.f32 %v282, %v360
  %v362 = vpop.f32.mrf.mxu0
  %363 = vmatprep.mubr.f32.mxu0 0.0
  %364 = vmatmul.mubr.f32.gmra.mxu0 %v248
  %v365 = vpop.f32.mrf.mxu0
  %v366 = vadd.f32 %v282, %v365
  %v367 = vpop.f32.mrf.mxu0
  %368 = vmatprep.mubr.f32.mxu0 0.0
  %369 = vmatmul.mubr.f32.gmra.mxu0 %v249
  %v370 = vpop.f32.mrf.mxu0
  %v371 = vadd.f32 %v282, %v370
  %v372 = vpop.f32.mrf.mxu0
  %373 = vmatprep.mubr.f32.mxu0 0.0
  %374 = vmatmul.mubr.f32.gmra.mxu0 %v250
  %v375 = vpop.f32.mrf.mxu0
  %v376 = vadd.f32 %v282, %v375
  %v377 = vpop.f32.mrf.mxu0
  %378 = vmatprep.mubr.f32.mxu0 0.0
  %379 = vmatmul.mubr.f32.gmra.mxu0 %v251
  %v380 = vpop.f32.mrf.mxu0
  %v381 = vadd.f32 %v282, %v380
  %v382 = vpop.f32.mrf.mxu0
  %383 = vmatprep.mubr.f32.mxu0 0.0
  %384 = vmatmul.mubr.f32.gmra.mxu0 %v252
  %v385 = vpop.f32.mrf.mxu0
  %v386 = vadd.f32 %v282, %v385
  %v387 = vpop.f32.mrf.mxu0
  %388 = vmatprep.mubr.f32.mxu0 0.0
  %389 = vmatmul.mubr.f32.gmra.mxu0 %v253
  %v390 = vpop.f32.mrf.mxu0
  %v391 = vadd.f32 %v282, %v390
  %v392 = vpop.f32.mrf.mxu0
  %393 = vmatprep.mubr.f32.mxu0 0.0
  %394 = vmatmul.mubr.f32.gmra.mxu0 %v254
  %v395 = vpop.f32.mrf.mxu0
  %v396 = vadd.f32 %v282, %v395
  %v397 = vpop.f32.mrf.mxu0
  %398 = vmatprep.mubr.f32.mxu0 0.0
  %399 = vmatmul.mubr.f32.gmra.mxu0 %v255
  %v400 = vpop.f32.mrf.mxu0
  %v401 = vadd.f32 %v282, %v400
  %v402 = vpop.f32.mrf.mxu0
  %403 = vmatprep.mubr.f32.mxu0 0.0
  %404 = vmatmul.mubr.f32.gmra.mxu0 %v256
  %v405 = vpop.f32.mrf.mxu0
  %v406 = vadd.f32 %v282, %v405
  %v407 = vpop.f32.mrf.mxu0
  %408 = vmatprep.mubr.f32.mxu0 0.0
  %409 = vmatmul.mubr.f32.gmra.mxu0 %v257
  %v410 = vpop.f32.mrf.mxu0
  %v411 = vadd.f32 %v282, %v410
  %v412 = vpop.f32.mrf.mxu0
  %413 = vmatprep.mubr.f32.mxu0 0.0
  %414 = vmatmul.mubr.f32.gmra.mxu0 %v258
  %v415 = vpop.f32.mrf.mxu0
  %v416 = vadd.f32 %v282, %v415
  %v417 = vpop.f32.mrf.mxu0
  %418 = vmatprep.mubr.f32.mxu0 0.0
  %419 = vmatmul.mubr.f32.gmra.mxu0 %v259
  %v420 = vpop.f32.mrf.mxu0
  %v421 = vadd.f32 %v282, %v420
  %v422 = vpop.f32.mrf.mxu0
  %423 = vmatprep.mubr.f32.mxu0 0.0
  %424 = vmatmul.mubr.f32.gmra.mxu0 %v260
  %v425 = vpop.f32.mrf.mxu0
  %v426 = vadd.f32 %v282, %v425
  %v427 = vpop.f32.mrf.mxu0
  %428 = vdwg.mxu0
  %v429 = vmax.f32 %v351, 0.0
  %v430 = vmax.f32 %v356, 0.0
  %v431 = vmax.f32 %v361, 0.0
  %v432 = vmax.f32 %v366, 0.0
  %v433 = vmax.f32 %v371, 0.0
  %v434 = vmax.f32 %v376, 0.0
  %v435 = vmax.f32 %v381, 0.0
  %v436 = vmax.f32 %v386, 0.0
  %v437 = vmax.f32 %v391, 0.0
  %v438 = vmax.f32 %v396, 0.0
  %v439 = vmax.f32 %v401, 0.0
  %v440 = vmax.f32 %v406, 0.0
  %v441 = vmax.f32 %v411, 0.0
  %v442 = vmax.f32 %v416, 0.0
  %v443 = vmax.f32 %v421, 0.0
  %v444 = vmax.f32 %v426, 0.0
  %v445 = vld [vmem:[%s5] sm:$0xff]
  %v446 = vld [vmem:[%s5 + $0x8] sm:$0xff]
  %v447 = vld [vmem:[%s5 + $0x10] sm:$0xff]
  %v448 = vld [vmem:[%s5 + $0x18] sm:$0xff]
  %v449 = vld [vmem:[%s5 + $0x20] sm:$0xff]
  %v450 = vld [vmem:[%s5 + $0x28] sm:$0xff]
  %v451 = vld [vmem:[%s5 + $0x30] sm:$0xff]
  %v452 = vld [vmem:[%s5 + $0x38] sm:$0xff]
  %v453 = vld [vmem:[%s5 + $0x40] sm:$0xff]
  %v454 = vld [vmem:[%s5 + $0x48] sm:$0xff]
  %v455 = vld [vmem:[%s5 + $0x50] sm:$0xff]
  %v456 = vld [vmem:[%s5 + $0x58] sm:$0xff]
  %v457 = vld [vmem:[%s5 + $0x60] sm:$0xff]
  %v458 = vld [vmem:[%s5 + $0x68] sm:$0xff]
  %v459 = vld [vmem:[%s5 + $0x70] sm:$0xff]
  %v460 = vld [vmem:[%s5 + $0x78] sm:$0xff]
  %v461 = vld [vmem:[%s6] sm:$0x1]
  %v463 = vlaneseq
  %v464 = vshrl.u32 %v463, 7
  %v465 = vsub.s32 0, %v464
  %v466 = vrot.slane %v461, %v465
  %468 = vmatprep.subr.mxu0 0.0
  %469 = vmatpush1.msra.mxu0 %v460
  %470 = vmatprep.subr.mxu0 0.0
  %471 = vmatpush1.msra.mxu0 %v459
  %472 = vmatprep.subr.mxu0 0.0
  %473 = vmatpush1.msra.mxu0 %v458
  %474 = vmatprep.subr.mxu0 0.0
  %475 = vmatpush1.msra.mxu0 %v457
  %476 = vmatprep.subr.mxu0 0.0
  %477 = vmatpush1.msra.mxu0 %v456
  %478 = vmatprep.subr.mxu0 0.0
  %479 = vmatpush1.msra.mxu0 %v455
  %480 = vmatprep.subr.mxu0 0.0
  %481 = vmatpush1.msra.mxu0 %v454
  %482 = vmatprep.subr.mxu0 0.0
  %483 = vmatpush1.msra.mxu0 %v453
  %484 = vmatprep.subr.mxu0 0.0
  %485 = vmatpush1.msra.mxu0 %v452
  %486 = vmatprep.subr.mxu0 0.0
  %487 = vmatpush1.msra.mxu0 %v451
  %488 = vmatprep.subr.mxu0 0.0
  %489 = vmatpush1.msra.mxu0 %v450
  %490 = vmatprep.subr.mxu0 0.0
  %491 = vmatpush1.msra.mxu0 %v449
  %492 = vmatprep.subr.mxu0 0.0
  %493 = vmatpush1.msra.mxu0 %v448
  %494 = vmatprep.subr.mxu0 0.0
  %495 = vmatpush1.msra.mxu0 %v447
  %496 = vmatprep.subr.mxu0 0.0
  %497 = vmatpush1.msra.mxu0 %v446
  %498 = vmatprep.subr.mxu0 0.0
  %499 = vmatpush1.msra.mxu0 %v445
  %500 = vmatprep.subr.mxu0 0.0
  %501 = vmatpush2.msra.mxu0 0.0
  %502 = vmatprep.subr.mxu0 0.0
  %503 = vmatpush2.msra.mxu0 0.0
  %504 = vmatprep.subr.mxu0 0.0
  %505 = vmatpush2.msra.mxu0 0.0
  %506 = vmatprep.subr.mxu0 0.0
  %507 = vmatpush2.msra.mxu0 0.0
  %508 = vmatprep.subr.mxu0 0.0
  %509 = vmatpush2.msra.mxu0 0.0
  %510 = vmatprep.subr.mxu0 0.0
  %511 = vmatpush2.msra.mxu0 0.0
  %512 = vmatprep.subr.mxu0 0.0
  %513 = vmatpush2.msra.mxu0 0.0
  %514 = vmatprep.subr.mxu0 0.0
  %515 = vmatpush2.msra.mxu0 0.0
  %516 = vmatprep.subr.mxu0 0.0
  %517 = vmatpush2.msra.mxu0 0.0
  %518 = vmatprep.subr.mxu0 0.0
  %519 = vmatpush2.msra.mxu0 0.0
  %520 = vmatprep.subr.mxu0 0.0
  %521 = vmatpush2.msra.mxu0 0.0
  %522 = vmatprep.subr.mxu0 0.0
  %523 = vmatpush2.msra.mxu0 0.0
  %524 = vmatprep.subr.mxu0 0.0
  %525 = vmatpush2.msra.mxu0 0.0
  %526 = vmatprep.subr.mxu0 0.0
  %527 = vmatpush2.msra.mxu0 0.0
  %528 = vmatprep.subr.mxu0 0.0
  %529 = vmatpush2.msra.mxu0 0.0
  %530 = vmatprep.subr.mxu0 0.0
  %531 = vmatpush2.msra.mxu0 0.0
  %532 = vmatprep.mubr.f32.mxu0 0.0
  %533 = vmatmul.mubr.f32.gmra.mxu0 %v429
  %v534 = vpop.f32.mrf.mxu0
  %v535 = vadd.f32 %v466, %v534
  %v536 = vpop.f32.mrf.mxu0
  %537 = vmatprep.mubr.f32.mxu0 0.0
  %538 = vmatmul.mubr.f32.gmra.mxu0 %v430
  %v539 = vpop.f32.mrf.mxu0
  %v540 = vadd.f32 %v466, %v539
  %v541 = vpop.f32.mrf.mxu0
  %542 = vmatprep.mubr.f32.mxu0 0.0
  %543 = vmatmul.mubr.f32.gmra.mxu0 %v431
  %v544 = vpop.f32.mrf.mxu0
  %v545 = vadd.f32 %v466, %v544
  %v546 = vpop.f32.mrf.mxu0
  %547 = vmatprep.mubr.f32.mxu0 0.0
  %548 = vmatmul.mubr.f32.gmra.mxu0 %v432
  %v549 = vpop.f32.mrf.mxu0
  %v550 = vadd.f32 %v466, %v549
  %v551 = vpop.f32.mrf.mxu0
  %552 = vmatprep.mubr.f32.mxu0 0.0
  %553 = vmatmul.mubr.f32.gmra.mxu0 %v433
  %v554 = vpop.f32.mrf.mxu0
  %v555 = vadd.f32 %v466, %v554
  %v556 = vpop.f32.mrf.mxu0
  %557 = vmatprep.mubr.f32.mxu0 0.0
  %558 = vmatmul.mubr.f32.gmra.mxu0 %v434
  %v559 = vpop.f32.mrf.mxu0
  %v560 = vadd.f32 %v466, %v559
  %v561 = vpop.f32.mrf.mxu0
  %562 = vmatprep.mubr.f32.mxu0 0.0
  %563 = vmatmul.mubr.f32.gmra.mxu0 %v435
  %v564 = vpop.f32.mrf.mxu0
  %v565 = vadd.f32 %v466, %v564
  %v566 = vpop.f32.mrf.mxu0
  %567 = vmatprep.mubr.f32.mxu0 0.0
  %568 = vmatmul.mubr.f32.gmra.mxu0 %v436
  %v569 = vpop.f32.mrf.mxu0
  %v570 = vadd.f32 %v466, %v569
  %v571 = vpop.f32.mrf.mxu0
  %572 = vmatprep.mubr.f32.mxu0 0.0
  %573 = vmatmul.mubr.f32.gmra.mxu0 %v437
  %v574 = vpop.f32.mrf.mxu0
  %v575 = vadd.f32 %v466, %v574
  %v576 = vpop.f32.mrf.mxu0
  %577 = vmatprep.mubr.f32.mxu0 0.0
  %578 = vmatmul.mubr.f32.gmra.mxu0 %v438
  %v579 = vpop.f32.mrf.mxu0
  %v580 = vadd.f32 %v466, %v579
  %v581 = vpop.f32.mrf.mxu0
  %582 = vmatprep.mubr.f32.mxu0 0.0
  %583 = vmatmul.mubr.f32.gmra.mxu0 %v439
  %v584 = vpop.f32.mrf.mxu0
  %v585 = vadd.f32 %v466, %v584
  %v586 = vpop.f32.mrf.mxu0
  %587 = vmatprep.mubr.f32.mxu0 0.0
  %588 = vmatmul.mubr.f32.gmra.mxu0 %v440
  %v589 = vpop.f32.mrf.mxu0
  %v590 = vadd.f32 %v466, %v589
  %v591 = vpop.f32.mrf.mxu0
  %592 = vmatprep.mubr.f32.mxu0 0.0
  %593 = vmatmul.mubr.f32.gmra.mxu0 %v441
  %v594 = vpop.f32.mrf.mxu0
  %v595 = vadd.f32 %v466, %v594
  %v596 = vpop.f32.mrf.mxu0
  %597 = vmatprep.mubr.f32.mxu0 0.0
  %598 = vmatmul.mubr.f32.gmra.mxu0 %v442
  %v599 = vpop.f32.mrf.mxu0
  %v600 = vadd.f32 %v466, %v599
  %v601 = vpop.f32.mrf.mxu0
  %602 = vmatprep.mubr.f32.mxu0 0.0
  %603 = vmatmul.mubr.f32.gmra.mxu0 %v443
  %v604 = vpop.f32.mrf.mxu0
  %v605 = vadd.f32 %v466, %v604
  %v606 = vpop.f32.mrf.mxu0
  %607 = vmatprep.mubr.f32.mxu0 0.0
  %608 = vmatmul.mubr.f32.gmra.mxu0 %v444
  %v609 = vpop.f32.mrf.mxu0
  %v610 = vadd.f32 %v466, %v609
  %v611 = vpop.f32.mrf.mxu0
  %612 = vdwg.mxu0
  %v613 = vmax.f32 %v535, 0.0
  %v614 = vmax.f32 %v540, 0.0
  %v615 = vmax.f32 %v545, 0.0
  %v616 = vmax.f32 %v550, 0.0
  %v617 = vmax.f32 %v555, 0.0
  %v618 = vmax.f32 %v560, 0.0
  %v619 = vmax.f32 %v565, 0.0
  %v620 = vmax.f32 %v570, 0.0
  %v621 = vmax.f32 %v575, 0.0
  %v622 = vmax.f32 %v580, 0.0
  %v623 = vmax.f32 %v585, 0.0
  %v624 = vmax.f32 %v590, 0.0
  %v625 = vmax.f32 %v595, 0.0
  %v626 = vmax.f32 %v600, 0.0
  %v627 = vmax.f32 %v605, 0.0
  %v628 = vmax.f32 %v610, 0.0
  %v629 = vld [vmem:[%s7] sm:$0xff]
  %v630 = vld [vmem:[%s7 + $0x8] sm:$0xff]
  %v631 = vld [vmem:[%s7 + $0x10] sm:$0xff]
  %v632 = vld [vmem:[%s7 + $0x18] sm:$0xff]
  %v633 = vld [vmem:[%s7 + $0x20] sm:$0xff]
  %v634 = vld [vmem:[%s7 + $0x28] sm:$0xff]
  %v635 = vld [vmem:[%s7 + $0x30] sm:$0xff]
  %v636 = vld [vmem:[%s7 + $0x38] sm:$0xff]
  %v637 = vld [vmem:[%s7 + $0x40] sm:$0xff]
  %v638 = vld [vmem:[%s7 + $0x48] sm:$0xff]
  %v639 = vld [vmem:[%s7 + $0x50] sm:$0xff]
  %v640 = vld [vmem:[%s7 + $0x58] sm:$0xff]
  %v641 = vld [vmem:[%s7 + $0x60] sm:$0xff]
  %v642 = vld [vmem:[%s7 + $0x68] sm:$0xff]
  %v643 = vld [vmem:[%s7 + $0x70] sm:$0xff]
  %v644 = vld [vmem:[%s7 + $0x78] sm:$0xff]
  %v645 = vld [vmem:[%s8] sm:$0x1]
  %v647 = vlaneseq
  %v648 = vshrl.u32 %v647, 7
  %v649 = vsub.s32 0, %v648
  %v650 = vrot.slane %v645, %v649
  %652 = vmatprep.subr.mxu0 0.0
  %653 = vmatpush1.msra.mxu0 %v644
  %654 = vmatprep.subr.mxu0 0.0
  %655 = vmatpush1.msra.mxu0 %v643
  %656 = vmatprep.subr.mxu0 0.0
  %657 = vmatpush1.msra.mxu0 %v642
  %658 = vmatprep.subr.mxu0 0.0
  %659 = vmatpush1.msra.mxu0 %v641
  %660 = vmatprep.subr.mxu0 0.0
  %661 = vmatpush1.msra.mxu0 %v640
  %662 = vmatprep.subr.mxu0 0.0
  %663 = vmatpush1.msra.mxu0 %v639
  %664 = vmatprep.subr.mxu0 0.0
  %665 = vmatpush1.msra.mxu0 %v638
  %666 = vmatprep.subr.mxu0 0.0
  %667 = vmatpush1.msra.mxu0 %v637
  %668 = vmatprep.subr.mxu0 0.0
  %669 = vmatpush1.msra.mxu0 %v636
  %670 = vmatprep.subr.mxu0 0.0
  %671 = vmatpush1.msra.mxu0 %v635
  %672 = vmatprep.subr.mxu0 0.0
  %673 = vmatpush1.msra.mxu0 %v634
  %674 = vmatprep.subr.mxu0 0.0
  %675 = vmatpush1.msra.mxu0 %v633
  %676 = vmatprep.subr.mxu0 0.0
  %677 = vmatpush1.msra.mxu0 %v632
  %678 = vmatprep.subr.mxu0 0.0
  %679 = vmatpush1.msra.mxu0 %v631
  %680 = vmatprep.subr.mxu0 0.0
  %681 = vmatpush1.msra.mxu0 %v630
  %682 = vmatprep.subr.mxu0 0.0
  %683 = vmatpush1.msra.mxu0 %v629
  %684 = vmatprep.subr.mxu0 0.0
  %685 = vmatpush2.msra.mxu0 0.0
  %686 = vmatprep.subr.mxu0 0.0
  %687 = vmatpush2.msra.mxu0 0.0
  %688 = vmatprep.subr.mxu0 0.0
  %689 = vmatpush2.msra.mxu0 0.0
  %690 = vmatprep.subr.mxu0 0.0
  %691 = vmatpush2.msra.mxu0 0.0
  %692 = vmatprep.subr.mxu0 0.0
  %693 = vmatpush2.msra.mxu0 0.0
  %694 = vmatprep.subr.mxu0 0.0
  %695 = vmatpush2.msra.mxu0 0.0
  %696 = vmatprep.subr.mxu0 0.0
  %697 = vmatpush2.msra.mxu0 0.0
  %698 = vmatprep.subr.mxu0 0.0
  %699 = vmatpush2.msra.mxu0 0.0
  %700 = vmatprep.subr.mxu0 0.0
  %701 = vmatpush2.msra.mxu0 0.0
  %702 = vmatprep.subr.mxu0 0.0
  %703 = vmatpush2.msra.mxu0 0.0
  %704 = vmatprep.subr.mxu0 0.0
  %705 = vmatpush2.msra.mxu0 0.0
  %706 = vmatprep.subr.mxu0 0.0
  %707 = vmatpush2.msra.mxu0 0.0
  %708 = vmatprep.subr.mxu0 0.0
  %709 = vmatpush2.msra.mxu0 0.0
  %710 = vmatprep.subr.mxu0 0.0
  %711 = vmatpush2.msra.mxu0 0.0
  %712 = vmatprep.subr.mxu0 0.0
  %713 = vmatpush2.msra.mxu0 0.0
  %714 = vmatprep.subr.mxu0 0.0
  %715 = vmatpush2.msra.mxu0 0.0
  %716 = vmatprep.mubr.f32.mxu0 0.0
  %717 = vmatmul.mubr.f32.gmra.mxu0 %v613
  %v718 = vpop.f32.mrf.mxu0
  %v719 = vadd.f32 %v650, %v718
  %v720 = vpop.f32.mrf.mxu0
  %721 = vmatprep.mubr.f32.mxu0 0.0
  %722 = vmatmul.mubr.f32.gmra.mxu0 %v614
  %v723 = vpop.f32.mrf.mxu0
  %v724 = vadd.f32 %v650, %v723
  %v725 = vpop.f32.mrf.mxu0
  %726 = vmatprep.mubr.f32.mxu0 0.0
  %727 = vmatmul.mubr.f32.gmra.mxu0 %v615
  %v728 = vpop.f32.mrf.mxu0
  %v729 = vadd.f32 %v650, %v728
  %v730 = vpop.f32.mrf.mxu0
  %731 = vmatprep.mubr.f32.mxu0 0.0
  %732 = vmatmul.mubr.f32.gmra.mxu0 %v616
  %v733 = vpop.f32.mrf.mxu0
  %v734 = vadd.f32 %v650, %v733
  %v735 = vpop.f32.mrf.mxu0
  %736 = vmatprep.mubr.f32.mxu0 0.0
  %737 = vmatmul.mubr.f32.gmra.mxu0 %v617
  %v738 = vpop.f32.mrf.mxu0
  %v739 = vadd.f32 %v650, %v738
  %v740 = vpop.f32.mrf.mxu0
  %741 = vmatprep.mubr.f32.mxu0 0.0
  %742 = vmatmul.mubr.f32.gmra.mxu0 %v618
  %v743 = vpop.f32.mrf.mxu0
  %v744 = vadd.f32 %v650, %v743
  %v745 = vpop.f32.mrf.mxu0
  %746 = vmatprep.mubr.f32.mxu0 0.0
  %747 = vmatmul.mubr.f32.gmra.mxu0 %v619
  %v748 = vpop.f32.mrf.mxu0
  %v749 = vadd.f32 %v650, %v748
  %v750 = vpop.f32.mrf.mxu0
  %751 = vmatprep.mubr.f32.mxu0 0.0
  %752 = vmatmul.mubr.f32.gmra.mxu0 %v620
  %v753 = vpop.f32.mrf.mxu0
  %v754 = vadd.f32 %v650, %v753
  %v755 = vpop.f32.mrf.mxu0
  %756 = vmatprep.mubr.f32.mxu0 0.0
  %757 = vmatmul.mubr.f32.gmra.mxu0 %v621
  %v758 = vpop.f32.mrf.mxu0
  %v759 = vadd.f32 %v650, %v758
  %v760 = vpop.f32.mrf.mxu0
  %761 = vmatprep.mubr.f32.mxu0 0.0
  %762 = vmatmul.mubr.f32.gmra.mxu0 %v622
  %v763 = vpop.f32.mrf.mxu0
  %v764 = vadd.f32 %v650, %v763
  %v765 = vpop.f32.mrf.mxu0
  %766 = vmatprep.mubr.f32.mxu0 0.0
  %767 = vmatmul.mubr.f32.gmra.mxu0 %v623
  %v768 = vpop.f32.mrf.mxu0
  %v769 = vadd.f32 %v650, %v768
  %v770 = vpop.f32.mrf.mxu0
  %771 = vmatprep.mubr.f32.mxu0 0.0
  %772 = vmatmul.mubr.f32.gmra.mxu0 %v624
  %v773 = vpop.f32.mrf.mxu0
  %v774 = vadd.f32 %v650, %v773
  %v775 = vpop.f32.mrf.mxu0
  %776 = vmatprep.mubr.f32.mxu0 0.0
  %777 = vmatmul.mubr.f32.gmra.mxu0 %v625
  %v778 = vpop.f32.mrf.mxu0
  %v779 = vadd.f32 %v650, %v778
  %v780 = vpop.f32.mrf.mxu0
  %781 = vmatprep.mubr.f32.mxu0 0.0
  %782 = vmatmul.mubr.f32.gmra.mxu0 %v626
  %v783 = vpop.f32.mrf.mxu0
  %v784 = vadd.f32 %v650, %v783
  %v785 = vpop.f32.mrf.mxu0
  %786 = vmatprep.mubr.f32.mxu0 0.0
  %787 = vmatmul.mubr.f32.gmra.mxu0 %v627
  %v788 = vpop.f32.mrf.mxu0
  %v789 = vadd.f32 %v650, %v788
  %v790 = vpop.f32.mrf.mxu0
  %791 = vmatprep.mubr.f32.mxu0 0.0
  %792 = vmatmul.mubr.f32.gmra.mxu0 %v628
  %v793 = vpop.f32.mrf.mxu0
  %v794 = vadd.f32 %v650, %v793
  %v795 = vpop.f32.mrf.mxu0
  %796 = vdwg.mxu0
  %v797 = vld [vmem:[%s9] sm:$0xff]
  %v798 = vld [vmem:[%s9 + $0x8] sm:$0xff]
  %v799 = vld [vmem:[%s9 + $0x10] sm:$0xff]
  %v800 = vld [vmem:[%s9 + $0x18] sm:$0xff]
  %v801 = vld [vmem:[%s9 + $0x20] sm:$0xff]
  %v802 = vld [vmem:[%s9 + $0x28] sm:$0xff]
  %v803 = vld [vmem:[%s9 + $0x30] sm:$0xff]
  %v804 = vld [vmem:[%s9 + $0x38] sm:$0xff]
  %v805 = vld [vmem:[%s9 + $0x40] sm:$0xff]
  %v806 = vld [vmem:[%s9 + $0x48] sm:$0xff]
  %v807 = vld [vmem:[%s9 + $0x50] sm:$0xff]
  %v808 = vld [vmem:[%s9 + $0x58] sm:$0xff]
  %v809 = vld [vmem:[%s9 + $0x60] sm:$0xff]
  %v810 = vld [vmem:[%s9 + $0x68] sm:$0xff]
  %v811 = vld [vmem:[%s9 + $0x70] sm:$0xff]
  %v812 = vld [vmem:[%s9 + $0x78] sm:$0xff]
  %v813 = vld [vmem:[%s10] sm:$0x1]
  %v815 = vlaneseq
  %v816 = vshrl.u32 %v815, 7
  %v817 = vsub.s32 0, %v816
  %v818 = vrot.slane %v813, %v817
  %820 = vmatprep.subr.mxu0 0.0
  %821 = vmatpush1.msra.mxu0 %v812
  %822 = vmatprep.subr.mxu0 0.0
  %823 = vmatpush1.msra.mxu0 %v811
  %824 = vmatprep.subr.mxu0 0.0
  %825 = vmatpush1.msra.mxu0 %v810
  %826 = vmatprep.subr.mxu0 0.0
  %827 = vmatpush1.msra.mxu0 %v809
  %828 = vmatprep.subr.mxu0 0.0
  %829 = vmatpush1.msra.mxu0 %v808
  %830 = vmatprep.subr.mxu0 0.0
  %831 = vmatpush1.msra.mxu0 %v807
  %832 = vmatprep.subr.mxu0 0.0
  %833 = vmatpush1.msra.mxu0 %v806
  %834 = vmatprep.subr.mxu0 0.0
  %835 = vmatpush1.msra.mxu0 %v805
  %836 = vmatprep.subr.mxu0 0.0
  %837 = vmatpush1.msra.mxu0 %v804
  %838 = vmatprep.subr.mxu0 0.0
  %839 = vmatpush1.msra.mxu0 %v803
  %840 = vmatprep.subr.mxu0 0.0
  %841 = vmatpush1.msra.mxu0 %v802
  %842 = vmatprep.subr.mxu0 0.0
  %843 = vmatpush1.msra.mxu0 %v801
  %844 = vmatprep.subr.mxu0 0.0
  %845 = vmatpush1.msra.mxu0 %v800
  %846 = vmatprep.subr.mxu0 0.0
  %847 = vmatpush1.msra.mxu0 %v799
  %848 = vmatprep.subr.mxu0 0.0
  %849 = vmatpush1.msra.mxu0 %v798
  %850 = vmatprep.subr.mxu0 0.0
  %851 = vmatpush1.msra.mxu0 %v797
  %852 = vmatprep.subr.mxu0 0.0
  %853 = vmatpush2.msra.mxu0 0.0
  %854 = vmatprep.subr.mxu0 0.0
  %855 = vmatpush2.msra.mxu0 0.0
  %856 = vmatprep.subr.mxu0 0.0
  %857 = vmatpush2.msra.mxu0 0.0
  %858 = vmatprep.subr.mxu0 0.0
  %859 = vmatpush2.msra.mxu0 0.0
  %860 = vmatprep.subr.mxu0 0.0
  %861 = vmatpush2.msra.mxu0 0.0
  %862 = vmatprep.subr.mxu0 0.0
  %863 = vmatpush2.msra.mxu0 0.0
  %864 = vmatprep.subr.mxu0 0.0
  %865 = vmatpush2.msra.mxu0 0.0
  %866 = vmatprep.subr.mxu0 0.0
  %867 = vmatpush2.msra.mxu0 0.0
  %868 = vmatprep.subr.mxu0 0.0
  %869 = vmatpush2.msra.mxu0 0.0
  %870 = vmatprep.subr.mxu0 0.0
  %871 = vmatpush2.msra.mxu0 0.0
  %872 = vmatprep.subr.mxu0 0.0
  %873 = vmatpush2.msra.mxu0 0.0
  %874 = vmatprep.subr.mxu0 0.0
  %875 = vmatpush2.msra.mxu0 0.0
  %876 = vmatprep.subr.mxu0 0.0
  %877 = vmatpush2.msra.mxu0 0.0
  %878 = vmatprep.subr.mxu0 0.0
  %879 = vmatpush2.msra.mxu0 0.0
  %880 = vmatprep.subr.mxu0 0.0
  %881 = vmatpush2.msra.mxu0 0.0
  %882 = vmatprep.subr.mxu0 0.0
  %883 = vmatpush2.msra.mxu0 0.0
  %884 = vmatprep.mubr.f32.mxu0 0.0
  %885 = vmatmul.mubr.f32.gmra.mxu0 %v719
  %v886 = vpop.f32.mrf.mxu0
  %v887 = vadd.f32 %v818, %v886
  %v888 = vpop.f32.mrf.mxu0
  %889 = vmatprep.mubr.f32.mxu0 0.0
  %890 = vmatmul.mubr.f32.gmra.mxu0 %v724
  %v891 = vpop.f32.mrf.mxu0
  %v892 = vadd.f32 %v818, %v891
  %v893 = vpop.f32.mrf.mxu0
  %894 = vmatprep.mubr.f32.mxu0 0.0
  %895 = vmatmul.mubr.f32.gmra.mxu0 %v729
  %v896 = vpop.f32.mrf.mxu0
  %v897 = vadd.f32 %v818, %v896
  %v898 = vpop.f32.mrf.mxu0
  %899 = vmatprep.mubr.f32.mxu0 0.0
  %900 = vmatmul.mubr.f32.gmra.mxu0 %v734
  %v901 = vpop.f32.mrf.mxu0
  %v902 = vadd.f32 %v818, %v901
  %v903 = vpop.f32.mrf.mxu0
  %904 = vmatprep.mubr.f32.mxu0 0.0
  %905 = vmatmul.mubr.f32.gmra.mxu0 %v739
  %v906 = vpop.f32.mrf.mxu0
  %v907 = vadd.f32 %v818, %v906
  %v908 = vpop.f32.mrf.mxu0
  %909 = vmatprep.mubr.f32.mxu0 0.0
  %910 = vmatmul.mubr.f32.gmra.mxu0 %v744
  %v911 = vpop.f32.mrf.mxu0
  %v912 = vadd.f32 %v818, %v911
  %v913 = vpop.f32.mrf.mxu0
  %914 = vmatprep.mubr.f32.mxu0 0.0
  %915 = vmatmul.mubr.f32.gmra.mxu0 %v749
  %v916 = vpop.f32.mrf.mxu0
  %v917 = vadd.f32 %v818, %v916
  %v918 = vpop.f32.mrf.mxu0
  %919 = vmatprep.mubr.f32.mxu0 0.0
  %920 = vmatmul.mubr.f32.gmra.mxu0 %v754
  %v921 = vpop.f32.mrf.mxu0
  %v922 = vadd.f32 %v818, %v921
  %v923 = vpop.f32.mrf.mxu0
  %924 = vmatprep.mubr.f32.mxu0 0.0
  %925 = vmatmul.mubr.f32.gmra.mxu0 %v759
  %v926 = vpop.f32.mrf.mxu0
  %v927 = vadd.f32 %v818, %v926
  %v928 = vpop.f32.mrf.mxu0
  %929 = vmatprep.mubr.f32.mxu0 0.0
  %930 = vmatmul.mubr.f32.gmra.mxu0 %v764
  %v931 = vpop.f32.mrf.mxu0
  %v932 = vadd.f32 %v818, %v931
  %v933 = vpop.f32.mrf.mxu0
  %934 = vmatprep.mubr.f32.mxu0 0.0
  %935 = vmatmul.mubr.f32.gmra.mxu0 %v769
  %v936 = vpop.f32.mrf.mxu0
  %v937 = vadd.f32 %v818, %v936
  %v938 = vpop.f32.mrf.mxu0
  %939 = vmatprep.mubr.f32.mxu0 0.0
  %940 = vmatmul.mubr.f32.gmra.mxu0 %v774
  %v941 = vpop.f32.mrf.mxu0
  %v942 = vadd.f32 %v818, %v941
  %v943 = vpop.f32.mrf.mxu0
  %944 = vmatprep.mubr.f32.mxu0 0.0
  %945 = vmatmul.mubr.f32.gmra.mxu0 %v779
  %v946 = vpop.f32.mrf.mxu0
  %v947 = vadd.f32 %v818, %v946
  %v948 = vpop.f32.mrf.mxu0
  %949 = vmatprep.mubr.f32.mxu0 0.0
  %950 = vmatmul.mubr.f32.gmra.mxu0 %v784
  %v951 = vpop.f32.mrf.mxu0
  %v952 = vadd.f32 %v818, %v951
  %v953 = vpop.f32.mrf.mxu0
  %954 = vmatprep.mubr.f32.mxu0 0.0
  %955 = vmatmul.mubr.f32.gmra.mxu0 %v789
  %v956 = vpop.f32.mrf.mxu0
  %v957 = vadd.f32 %v818, %v956
  %v958 = vpop.f32.mrf.mxu0
  %959 = vmatprep.mubr.f32.mxu0 0.0
  %960 = vmatmul.mubr.f32.gmra.mxu0 %v794
  %v961 = vpop.f32.mrf.mxu0
  %v962 = vadd.f32 %v818, %v961
  %v963 = vpop.f32.mrf.mxu0
  %964 = vdwg.mxu0
  %v965 = vmax.f32 %v887, 0.0
  %v966 = vmax.f32 %v892, 0.0
  %v967 = vmax.f32 %v897, 0.0
  %v968 = vmax.f32 %v902, 0.0
  %v969 = vmax.f32 %v907, 0.0
  %v970 = vmax.f32 %v912, 0.0
  %v971 = vmax.f32 %v917, 0.0
  %v972 = vmax.f32 %v922, 0.0
  %v973 = vmax.f32 %v927, 0.0
  %v974 = vmax.f32 %v932, 0.0
  %v975 = vmax.f32 %v937, 0.0
  %v976 = vmax.f32 %v942, 0.0
  %v977 = vmax.f32 %v947, 0.0
  %v978 = vmax.f32 %v952, 0.0
  %v979 = vmax.f32 %v957, 0.0
  %v980 = vmax.f32 %v962, 0.0
  %v981 = vld [vmem:[%s11] sm:$0xff]
  %v982 = vld [vmem:[%s11 + $0x8] sm:$0xff]
  %v983 = vld [vmem:[%s11 + $0x10] sm:$0xff]
  %v984 = vld [vmem:[%s11 + $0x18] sm:$0xff]
  %v985 = vld [vmem:[%s11 + $0x20] sm:$0xff]
  %v986 = vld [vmem:[%s11 + $0x28] sm:$0xff]
  %v987 = vld [vmem:[%s11 + $0x30] sm:$0xff]
  %v988 = vld [vmem:[%s11 + $0x38] sm:$0xff]
  %v989 = vld [vmem:[%s11 + $0x40] sm:$0xff]
  %v990 = vld [vmem:[%s11 + $0x48] sm:$0xff]
  %v991 = vld [vmem:[%s11 + $0x50] sm:$0xff]
  %v992 = vld [vmem:[%s11 + $0x58] sm:$0xff]
  %v993 = vld [vmem:[%s11 + $0x60] sm:$0xff]
  %v994 = vld [vmem:[%s11 + $0x68] sm:$0xff]
  %v995 = vld [vmem:[%s11 + $0x70] sm:$0xff]
  %v996 = vld [vmem:[%s11 + $0x78] sm:$0xff]
  %v997 = vld [vmem:[%s12] sm:$0x1]
  %v999 = vlaneseq
  %v1000 = vshrl.u32 %v999, 7
  %v1001 = vsub.s32 0, %v1000
  %v1002 = vrot.slane %v997, %v1001
  %1004 = vmatprep.subr.mxu0 0.0
  %1005 = vmatpush1.msra.mxu0 %v996
  %1006 = vmatprep.subr.mxu0 0.0
  %1007 = vmatpush1.msra.mxu0 %v995
  %1008 = vmatprep.subr.mxu0 0.0
  %1009 = vmatpush1.msra.mxu0 %v994
  %1010 = vmatprep.subr.mxu0 0.0
  %1011 = vmatpush1.msra.mxu0 %v993
  %1012 = vmatprep.subr.mxu0 0.0
  %1013 = vmatpush1.msra.mxu0 %v992
  %1014 = vmatprep.subr.mxu0 0.0
  %1015 = vmatpush1.msra.mxu0 %v991
  %1016 = vmatprep.subr.mxu0 0.0
  %1017 = vmatpush1.msra.mxu0 %v990
  %1018 = vmatprep.subr.mxu0 0.0
  %1019 = vmatpush1.msra.mxu0 %v989
  %1020 = vmatprep.subr.mxu0 0.0
  %1021 = vmatpush1.msra.mxu0 %v988
  %1022 = vmatprep.subr.mxu0 0.0
  %1023 = vmatpush1.msra.mxu0 %v987
  %1024 = vmatprep.subr.mxu0 0.0
  %1025 = vmatpush1.msra.mxu0 %v986
  %1026 = vmatprep.subr.mxu0 0.0
  %1027 = vmatpush1.msra.mxu0 %v985
  %1028 = vmatprep.subr.mxu0 0.0
  %1029 = vmatpush1.msra.mxu0 %v984
  %1030 = vmatprep.subr.mxu0 0.0
  %1031 = vmatpush1.msra.mxu0 %v983
  %1032 = vmatprep.subr.mxu0 0.0
  %1033 = vmatpush1.msra.mxu0 %v982
  %1034 = vmatprep.subr.mxu0 0.0
  %1035 = vmatpush1.msra.mxu0 %v981
  %1036 = vmatprep.subr.mxu0 0.0
  %1037 = vmatpush2.msra.mxu0 0.0
  %1038 = vmatprep.subr.mxu0 0.0
  %1039 = vmatpush2.msra.mxu0 0.0
  %1040 = vmatprep.subr.mxu0 0.0
  %1041 = vmatpush2.msra.mxu0 0.0
  %1042 = vmatprep.subr.mxu0 0.0
  %1043 = vmatpush2.msra.mxu0 0.0
  %1044 = vmatprep.subr.mxu0 0.0
  %1045 = vmatpush2.msra.mxu0 0.0
  %1046 = vmatprep.subr.mxu0 0.0
  %1047 = vmatpush2.msra.mxu0 0.0
  %1048 = vmatprep.subr.mxu0 0.0
  %1049 = vmatpush2.msra.mxu0 0.0
  %1050 = vmatprep.subr.mxu0 0.0
  %1051 = vmatpush2.msra.mxu0 0.0
  %1052 = vmatprep.subr.mxu0 0.0
  %1053 = vmatpush2.msra.mxu0 0.0
  %1054 = vmatprep.subr.mxu0 0.0
  %1055 = vmatpush2.msra.mxu0 0.0
  %1056 = vmatprep.subr.mxu0 0.0
  %1057 = vmatpush2.msra.mxu0 0.0
  %1058 = vmatprep.subr.mxu0 0.0
  %1059 = vmatpush2.msra.mxu0 0.0
  %1060 = vmatprep.subr.mxu0 0.0
  %1061 = vmatpush2.msra.mxu0 0.0
  %1062 = vmatprep.subr.mxu0 0.0
  %1063 = vmatpush2.msra.mxu0 0.0
  %1064 = vmatprep.subr.mxu0 0.0
  %1065 = vmatpush2.msra.mxu0 0.0
  %1066 = vmatprep.subr.mxu0 0.0
  %1067 = vmatpush2.msra.mxu0 0.0
  %1068 = vmatprep.mubr.f32.mxu0 0.0
  %1069 = vmatmul.mubr.f32.gmra.mxu0 %v965
  %v1070 = vpop.f32.mrf.mxu0
  %v1071 = vadd.f32 %v1002, %v1070
  %v1072 = vpop.f32.mrf.mxu0
  %1073 = vmatprep.mubr.f32.mxu0 0.0
  %1074 = vmatmul.mubr.f32.gmra.mxu0 %v966
  %v1075 = vpop.f32.mrf.mxu0
  %v1076 = vadd.f32 %v1002, %v1075
  %v1077 = vpop.f32.mrf.mxu0
  %1078 = vmatprep.mubr.f32.mxu0 0.0
  %1079 = vmatmul.mubr.f32.gmra.mxu0 %v967
  %v1080 = vpop.f32.mrf.mxu0
  %v1081 = vadd.f32 %v1002, %v1080
  %v1082 = vpop.f32.mrf.mxu0
  %1083 = vmatprep.mubr.f32.mxu0 0.0
  %1084 = vmatmul.mubr.f32.gmra.mxu0 %v968
  %v1085 = vpop.f32.mrf.mxu0
  %v1086 = vadd.f32 %v1002, %v1085
  %v1087 = vpop.f32.mrf.mxu0
  %1088 = vmatprep.mubr.f32.mxu0 0.0
  %1089 = vmatmul.mubr.f32.gmra.mxu0 %v969
  %v1090 = vpop.f32.mrf.mxu0
  %v1091 = vadd.f32 %v1002, %v1090
  %v1092 = vpop.f32.mrf.mxu0
  %1093 = vmatprep.mubr.f32.mxu0 0.0
  %1094 = vmatmul.mubr.f32.gmra.mxu0 %v970
  %v1095 = vpop.f32.mrf.mxu0
  %v1096 = vadd.f32 %v1002, %v1095
  %v1097 = vpop.f32.mrf.mxu0
  %1098 = vmatprep.mubr.f32.mxu0 0.0
  %1099 = vmatmul.mubr.f32.gmra.mxu0 %v971
  %v1100 = vpop.f32.mrf.mxu0
  %v1101 = vadd.f32 %v1002, %v1100
  %v1102 = vpop.f32.mrf.mxu0
  %1103 = vmatprep.mubr.f32.mxu0 0.0
  %1104 = vmatmul.mubr.f32.gmra.mxu0 %v972
  %v1105 = vpop.f32.mrf.mxu0
  %v1106 = vadd.f32 %v1002, %v1105
  %v1107 = vpop.f32.mrf.mxu0
  %1108 = vmatprep.mubr.f32.mxu0 0.0
  %1109 = vmatmul.mubr.f32.gmra.mxu0 %v973
  %v1110 = vpop.f32.mrf.mxu0
  %v1111 = vadd.f32 %v1002, %v1110
  %v1112 = vpop.f32.mrf.mxu0
  %1113 = vmatprep.mubr.f32.mxu0 0.0
  %1114 = vmatmul.mubr.f32.gmra.mxu0 %v974
  %v1115 = vpop.f32.mrf.mxu0
  %v1116 = vadd.f32 %v1002, %v1115
  %v1117 = vpop.f32.mrf.mxu0
  %1118 = vmatprep.mubr.f32.mxu0 0.0
  %1119 = vmatmul.mubr.f32.gmra.mxu0 %v975
  %v1120 = vpop.f32.mrf.mxu0
  %v1121 = vadd.f32 %v1002, %v1120
  %v1122 = vpop.f32.mrf.mxu0
  %1123 = vmatprep.mubr.f32.mxu0 0.0
  %1124 = vmatmul.mubr.f32.gmra.mxu0 %v976
  %v1125 = vpop.f32.mrf.mxu0
  %v1126 = vadd.f32 %v1002, %v1125
  %v1127 = vpop.f32.mrf.mxu0
  %1128 = vmatprep.mubr.f32.mxu0 0.0
  %1129 = vmatmul.mubr.f32.gmra.mxu0 %v977
  %v1130 = vpop.f32.mrf.mxu0
  %v1131 = vadd.f32 %v1002, %v1130
  %v1132 = vpop.f32.mrf.mxu0
  %1133 = vmatprep.mubr.f32.mxu0 0.0
  %1134 = vmatmul.mubr.f32.gmra.mxu0 %v978
  %v1135 = vpop.f32.mrf.mxu0
  %v1136 = vadd.f32 %v1002, %v1135
  %v1137 = vpop.f32.mrf.mxu0
  %1138 = vmatprep.mubr.f32.mxu0 0.0
  %1139 = vmatmul.mubr.f32.gmra.mxu0 %v979
  %v1140 = vpop.f32.mrf.mxu0
  %v1141 = vadd.f32 %v1002, %v1140
  %v1142 = vpop.f32.mrf.mxu0
  %1143 = vmatprep.mubr.f32.mxu0 0.0
  %1144 = vmatmul.mubr.f32.gmra.mxu0 %v980
  %v1145 = vpop.f32.mrf.mxu0
  %v1146 = vadd.f32 %v1002, %v1145
  %v1147 = vpop.f32.mrf.mxu0
  %1148 = vdwg.mxu0
  %v1149 = vmax.f32 %v1071, 0.0
  %v1150 = vmax.f32 %v1076, 0.0
  %v1151 = vmax.f32 %v1081, 0.0
  %v1152 = vmax.f32 %v1086, 0.0
  %v1153 = vmax.f32 %v1091, 0.0
  %v1154 = vmax.f32 %v1096, 0.0
  %v1155 = vmax.f32 %v1101, 0.0
  %v1156 = vmax.f32 %v1106, 0.0
  %v1157 = vmax.f32 %v1111, 0.0
  %v1158 = vmax.f32 %v1116, 0.0
  %v1159 = vmax.f32 %v1121, 0.0
  %v1160 = vmax.f32 %v1126, 0.0
  %v1161 = vmax.f32 %v1131, 0.0
  %v1162 = vmax.f32 %v1136, 0.0
  %v1163 = vmax.f32 %v1141, 0.0
  %v1164 = vmax.f32 %v1146, 0.0
  %v1165 = vld [vmem:[%s13] sm:$0xff]
  %v1166 = vld [vmem:[%s13 + $0x8] sm:$0xff]
  %v1167 = vld [vmem:[%s13 + $0x10] sm:$0xff]
  %v1168 = vld [vmem:[%s13 + $0x18] sm:$0xff]
  %v1169 = vld [vmem:[%s13 + $0x20] sm:$0xff]
  %v1170 = vld [vmem:[%s13 + $0x28] sm:$0xff]
  %v1171 = vld [vmem:[%s13 + $0x30] sm:$0xff]
  %v1172 = vld [vmem:[%s13 + $0x38] sm:$0xff]
  %v1173 = vld [vmem:[%s13 + $0x40] sm:$0xff]
  %v1174 = vld [vmem:[%s13 + $0x48] sm:$0xff]
  %v1175 = vld [vmem:[%s13 + $0x50] sm:$0xff]
  %v1176 = vld [vmem:[%s13 + $0x58] sm:$0xff]
  %v1177 = vld [vmem:[%s13 + $0x60] sm:$0xff]
  %v1178 = vld [vmem:[%s13 + $0x68] sm:$0xff]
  %v1179 = vld [vmem:[%s13 + $0x70] sm:$0xff]
  %v1180 = vld [vmem:[%s13 + $0x78] sm:$0xff]
  %v1181 = vld [vmem:[%s14] sm:$0x1]
  %v1183 = vlaneseq
  %v1184 = vshrl.u32 %v1183, 7
  %v1185 = vsub.s32 0, %v1184
  %v1186 = vrot.slane %v1181, %v1185
  %1188 = vmatprep.subr.mxu0 0.0
  %1189 = vmatpush1.msra.mxu0 %v1180
  %1190 = vmatprep.subr.mxu0 0.0
  %1191 = vmatpush1.msra.mxu0 %v1179
  %1192 = vmatprep.subr.mxu0 0.0
  %1193 = vmatpush1.msra.mxu0 %v1178
  %1194 = vmatprep.subr.mxu0 0.0
  %1195 = vmatpush1.msra.mxu0 %v1177
  %1196 = vmatprep.subr.mxu0 0.0
  %1197 = vmatpush1.msra.mxu0 %v1176
  %1198 = vmatprep.subr.mxu0 0.0
  %1199 = vmatpush1.msra.mxu0 %v1175
  %1200 = vmatprep.subr.mxu0 0.0
  %1201 = vmatpush1.msra.mxu0 %v1174
  %1202 = vmatprep.subr.mxu0 0.0
  %1203 = vmatpush1.msra.mxu0 %v1173
  %1204 = vmatprep.subr.mxu0 0.0
  %1205 = vmatpush1.msra.mxu0 %v1172
  %1206 = vmatprep.subr.mxu0 0.0
  %1207 = vmatpush1.msra.mxu0 %v1171
  %1208 = vmatprep.subr.mxu0 0.0
  %1209 = vmatpush1.msra.mxu0 %v1170
  %1210 = vmatprep.subr.mxu0 0.0
  %1211 = vmatpush1.msra.mxu0 %v1169
  %1212 = vmatprep.subr.mxu0 0.0
  %1213 = vmatpush1.msra.mxu0 %v1168
  %1214 = vmatprep.subr.mxu0 0.0
  %1215 = vmatpush1.msra.mxu0 %v1167
  %1216 = vmatprep.subr.mxu0 0.0
  %1217 = vmatpush1.msra.mxu0 %v1166
  %1218 = vmatprep.subr.mxu0 0.0
  %1219 = vmatpush1.msra.mxu0 %v1165
  %1220 = vmatprep.subr.mxu0 0.0
  %1221 = vmatpush2.msra.mxu0 0.0
  %1222 = vmatprep.subr.mxu0 0.0
  %1223 = vmatpush2.msra.mxu0 0.0
  %1224 = vmatprep.subr.mxu0 0.0
  %1225 = vmatpush2.msra.mxu0 0.0
  %1226 = vmatprep.subr.mxu0 0.0
  %1227 = vmatpush2.msra.mxu0 0.0
  %1228 = vmatprep.subr.mxu0 0.0
  %1229 = vmatpush2.msra.mxu0 0.0
  %1230 = vmatprep.subr.mxu0 0.0
  %1231 = vmatpush2.msra.mxu0 0.0
  %1232 = vmatprep.subr.mxu0 0.0
  %1233 = vmatpush2.msra.mxu0 0.0
  %1234 = vmatprep.subr.mxu0 0.0
  %1235 = vmatpush2.msra.mxu0 0.0
  %1236 = vmatprep.subr.mxu0 0.0
  %1237 = vmatpush2.msra.mxu0 0.0
  %1238 = vmatprep.subr.mxu0 0.0
  %1239 = vmatpush2.msra.mxu0 0.0
  %1240 = vmatprep.subr.mxu0 0.0
  %1241 = vmatpush2.msra.mxu0 0.0
  %1242 = vmatprep.subr.mxu0 0.0
  %1243 = vmatpush2.msra.mxu0 0.0
  %1244 = vmatprep.subr.mxu0 0.0
  %1245 = vmatpush2.msra.mxu0 0.0
  %1246 = vmatprep.subr.mxu0 0.0
  %1247 = vmatpush2.msra.mxu0 0.0
  %1248 = vmatprep.subr.mxu0 0.0
  %1249 = vmatpush2.msra.mxu0 0.0
  %1250 = vmatprep.subr.mxu0 0.0
  %1251 = vmatpush2.msra.mxu0 0.0
  %1252 = vmatprep.mubr.f32.mxu0 0.0
  %1253 = vmatmul.mubr.f32.gmra.mxu0 %v1149
  %v1254 = vpop.f32.mrf.mxu0
  %v1255 = vadd.f32 %v1186, %v1254
  %v1256 = vpop.f32.mrf.mxu0
  %1257 = vmatprep.mubr.f32.mxu0 0.0
  %1258 = vmatmul.mubr.f32.gmra.mxu0 %v1150
  %v1259 = vpop.f32.mrf.mxu0
  %v1260 = vadd.f32 %v1186, %v1259
  %v1261 = vpop.f32.mrf.mxu0
  %1262 = vmatprep.mubr.f32.mxu0 0.0
  %1263 = vmatmul.mubr.f32.gmra.mxu0 %v1151
  %v1264 = vpop.f32.mrf.mxu0
  %v1265 = vadd.f32 %v1186, %v1264
  %v1266 = vpop.f32.mrf.mxu0
  %1267 = vmatprep.mubr.f32.mxu0 0.0
  %1268 = vmatmul.mubr.f32.gmra.mxu0 %v1152
  %v1269 = vpop.f32.mrf.mxu0
  %v1270 = vadd.f32 %v1186, %v1269
  %v1271 = vpop.f32.mrf.mxu0
  %1272 = vmatprep.mubr.f32.mxu0 0.0
  %1273 = vmatmul.mubr.f32.gmra.mxu0 %v1153
  %v1274 = vpop.f32.mrf.mxu0
  %v1275 = vadd.f32 %v1186, %v1274
  %v1276 = vpop.f32.mrf.mxu0
  %1277 = vmatprep.mubr.f32.mxu0 0.0
  %1278 = vmatmul.mubr.f32.gmra.mxu0 %v1154
  %v1279 = vpop.f32.mrf.mxu0
  %v1280 = vadd.f32 %v1186, %v1279
  %v1281 = vpop.f32.mrf.mxu0
  %1282 = vmatprep.mubr.f32.mxu0 0.0
  %1283 = vmatmul.mubr.f32.gmra.mxu0 %v1155
  %v1284 = vpop.f32.mrf.mxu0
  %v1285 = vadd.f32 %v1186, %v1284
  %v1286 = vpop.f32.mrf.mxu0
  %1287 = vmatprep.mubr.f32.mxu0 0.0
  %1288 = vmatmul.mubr.f32.gmra.mxu0 %v1156
  %v1289 = vpop.f32.mrf.mxu0
  %v1290 = vadd.f32 %v1186, %v1289
  %v1291 = vpop.f32.mrf.mxu0
  %1292 = vmatprep.mubr.f32.mxu0 0.0
  %1293 = vmatmul.mubr.f32.gmra.mxu0 %v1157
  %v1294 = vpop.f32.mrf.mxu0
  %v1295 = vadd.f32 %v1186, %v1294
  %v1296 = vpop.f32.mrf.mxu0
  %1297 = vmatprep.mubr.f32.mxu0 0.0
  %1298 = vmatmul.mubr.f32.gmra.mxu0 %v1158
  %v1299 = vpop.f32.mrf.mxu0
  %v1300 = vadd.f32 %v1186, %v1299
  %v1301 = vpop.f32.mrf.mxu0
  %1302 = vmatprep.mubr.f32.mxu0 0.0
  %1303 = vmatmul.mubr.f32.gmra.mxu0 %v1159
  %v1304 = vpop.f32.mrf.mxu0
  %v1305 = vadd.f32 %v1186, %v1304
  %v1306 = vpop.f32.mrf.mxu0
  %1307 = vmatprep.mubr.f32.mxu0 0.0
  %1308 = vmatmul.mubr.f32.gmra.mxu0 %v1160
  %v1309 = vpop.f32.mrf.mxu0
  %v1310 = vadd.f32 %v1186, %v1309
  %v1311 = vpop.f32.mrf.mxu0
  %1312 = vmatprep.mubr.f32.mxu0 0.0
  %1313 = vmatmul.mubr.f32.gmra.mxu0 %v1161
  %v1314 = vpop.f32.mrf.mxu0
  %v1315 = vadd.f32 %v1186, %v1314
  %v1316 = vpop.f32.mrf.mxu0
  %1317 = vmatprep.mubr.f32.mxu0 0.0
  %1318 = vmatmul.mubr.f32.gmra.mxu0 %v1162
  %v1319 = vpop.f32.mrf.mxu0
  %v1320 = vadd.f32 %v1186, %v1319
  %v1321 = vpop.f32.mrf.mxu0
  %1322 = vmatprep.mubr.f32.mxu0 0.0
  %1323 = vmatmul.mubr.f32.gmra.mxu0 %v1163
  %v1324 = vpop.f32.mrf.mxu0
  %v1325 = vadd.f32 %v1186, %v1324
  %v1326 = vpop.f32.mrf.mxu0
  %1327 = vmatprep.mubr.f32.mxu0 0.0
  %1328 = vmatmul.mubr.f32.gmra.mxu0 %v1164
  %v1329 = vpop.f32.mrf.mxu0
  %v1330 = vadd.f32 %v1186, %v1329
  %v1331 = vpop.f32.mrf.mxu0
  %1332 = vdwg.mxu0
  %v1333 = vmax.f32 %v1255, 0.0
  %v1334 = vmax.f32 %v1260, 0.0
  %v1335 = vmax.f32 %v1265, 0.0
  %v1336 = vmax.f32 %v1270, 0.0
  %v1337 = vmax.f32 %v1275, 0.0
  %v1338 = vmax.f32 %v1280, 0.0
  %v1339 = vmax.f32 %v1285, 0.0
  %v1340 = vmax.f32 %v1290, 0.0
  %v1341 = vmax.f32 %v1295, 0.0
  %v1342 = vmax.f32 %v1300, 0.0
  %v1343 = vmax.f32 %v1305, 0.0
  %v1344 = vmax.f32 %v1310, 0.0
  %v1345 = vmax.f32 %v1315, 0.0
  %v1346 = vmax.f32 %v1320, 0.0
  %v1347 = vmax.f32 %v1325, 0.0
  %v1348 = vmax.f32 %v1330, 0.0
  %v1349 = vld [vmem:[%s15] sm:$0xff]
  %v1350 = vld [vmem:[%s15 + $0x8] sm:$0xff]
  %v1351 = vld [vmem:[%s15 + $0x10] sm:$0xff]
  %v1352 = vld [vmem:[%s15 + $0x18] sm:$0xff]
  %v1353 = vld [vmem:[%s15 + $0x20] sm:$0xff]
  %v1354 = vld [vmem:[%s15 + $0x28] sm:$0xff]
  %v1355 = vld [vmem:[%s15 + $0x30] sm:$0xff]
  %v1356 = vld [vmem:[%s15 + $0x38] sm:$0xff]
  %v1357 = vld [vmem:[%s15 + $0x40] sm:$0xff]
  %v1358 = vld [vmem:[%s15 + $0x48] sm:$0xff]
  %v1359 = vld [vmem:[%s15 + $0x50] sm:$0xff]
  %v1360 = vld [vmem:[%s15 + $0x58] sm:$0xff]
  %v1361 = vld [vmem:[%s15 + $0x60] sm:$0xff]
  %v1362 = vld [vmem:[%s15 + $0x68] sm:$0xff]
  %v1363 = vld [vmem:[%s15 + $0x70] sm:$0xff]
  %v1364 = vld [vmem:[%s15 + $0x78] sm:$0xff]
  %v1365 = vld [vmem:[%s16] sm:$0x1]
  %v1367 = vlaneseq
  %v1368 = vshrl.u32 %v1367, 7
  %v1369 = vsub.s32 0, %v1368
  %v1370 = vrot.slane %v1365, %v1369
  %1372 = vmatprep.subr.mxu0 0.0
  %1373 = vmatpush1.msra.mxu0 %v1364
  %1374 = vmatprep.subr.mxu0 0.0
  %1375 = vmatpush1.msra.mxu0 %v1363
  %1376 = vmatprep.subr.mxu0 0.0
  %1377 = vmatpush1.msra.mxu0 %v1362
  %1378 = vmatprep.subr.mxu0 0.0
  %1379 = vmatpush1.msra.mxu0 %v1361
  %1380 = vmatprep.subr.mxu0 0.0
  %1381 = vmatpush1.msra.mxu0 %v1360
  %1382 = vmatprep.subr.mxu0 0.0
  %1383 = vmatpush1.msra.mxu0 %v1359
  %1384 = vmatprep.subr.mxu0 0.0
  %1385 = vmatpush1.msra.mxu0 %v1358
  %1386 = vmatprep.subr.mxu0 0.0
  %1387 = vmatpush1.msra.mxu0 %v1357
  %1388 = vmatprep.subr.mxu0 0.0
  %1389 = vmatpush1.msra.mxu0 %v1356
  %1390 = vmatprep.subr.mxu0 0.0
  %1391 = vmatpush1.msra.mxu0 %v1355
  %1392 = vmatprep.subr.mxu0 0.0
  %1393 = vmatpush1.msra.mxu0 %v1354
  %1394 = vmatprep.subr.mxu0 0.0
  %1395 = vmatpush1.msra.mxu0 %v1353
  %1396 = vmatprep.subr.mxu0 0.0
  %1397 = vmatpush1.msra.mxu0 %v1352
  %1398 = vmatprep.subr.mxu0 0.0
  %1399 = vmatpush1.msra.mxu0 %v1351
  %1400 = vmatprep.subr.mxu0 0.0
  %1401 = vmatpush1.msra.mxu0 %v1350
  %1402 = vmatprep.subr.mxu0 0.0
  %1403 = vmatpush1.msra.mxu0 %v1349
  %1404 = vmatprep.subr.mxu0 0.0
  %1405 = vmatpush2.msra.mxu0 0.0
  %1406 = vmatprep.subr.mxu0 0.0
  %1407 = vmatpush2.msra.mxu0 0.0
  %1408 = vmatprep.subr.mxu0 0.0
  %1409 = vmatpush2.msra.mxu0 0.0
  %1410 = vmatprep.subr.mxu0 0.0
  %1411 = vmatpush2.msra.mxu0 0.0
  %1412 = vmatprep.subr.mxu0 0.0
  %1413 = vmatpush2.msra.mxu0 0.0
  %1414 = vmatprep.subr.mxu0 0.0
  %1415 = vmatpush2.msra.mxu0 0.0
  %1416 = vmatprep.subr.mxu0 0.0
  %1417 = vmatpush2.msra.mxu0 0.0
  %1418 = vmatprep.subr.mxu0 0.0
  %1419 = vmatpush2.msra.mxu0 0.0
  %1420 = vmatprep.subr.mxu0 0.0
  %1421 = vmatpush2.msra.mxu0 0.0
  %1422 = vmatprep.subr.mxu0 0.0
  %1423 = vmatpush2.msra.mxu0 0.0
  %1424 = vmatprep.subr.mxu0 0.0
  %1425 = vmatpush2.msra.mxu0 0.0
  %1426 = vmatprep.subr.mxu0 0.0
  %1427 = vmatpush2.msra.mxu0 0.0
  %1428 = vmatprep.subr.mxu0 0.0
  %1429 = vmatpush2.msra.mxu0 0.0
  %1430 = vmatprep.subr.mxu0 0.0
  %1431 = vmatpush2.msra.mxu0 0.0
  %1432 = vmatprep.subr.mxu0 0.0
  %1433 = vmatpush2.msra.mxu0 0.0
  %1434 = vmatprep.subr.mxu0 0.0
  %1435 = vmatpush2.msra.mxu0 0.0
  %1436 = vmatprep.mubr.f32.mxu0 0.0
  %1437 = vmatmul.mubr.f32.gmra.mxu0 %v1333
  %v1438 = vpop.f32.mrf.mxu0
  %v1439 = vadd.f32 %v1370, %v1438
  %v1440 = vpop.f32.mrf.mxu0
  %1441 = vmatprep.mubr.f32.mxu0 0.0
  %1442 = vmatmul.mubr.f32.gmra.mxu0 %v1334
  %v1443 = vpop.f32.mrf.mxu0
  %v1444 = vadd.f32 %v1370, %v1443
  %v1445 = vpop.f32.mrf.mxu0
  %1446 = vmatprep.mubr.f32.mxu0 0.0
  %1447 = vmatmul.mubr.f32.gmra.mxu0 %v1335
  %v1448 = vpop.f32.mrf.mxu0
  %v1449 = vadd.f32 %v1370, %v1448
  %v1450 = vpop.f32.mrf.mxu0
  %1451 = vmatprep.mubr.f32.mxu0 0.0
  %1452 = vmatmul.mubr.f32.gmra.mxu0 %v1336
  %v1453 = vpop.f32.mrf.mxu0
  %v1454 = vadd.f32 %v1370, %v1453
  %v1455 = vpop.f32.mrf.mxu0
  %1456 = vmatprep.mubr.f32.mxu0 0.0
  %1457 = vmatmul.mubr.f32.gmra.mxu0 %v1337
  %v1458 = vpop.f32.mrf.mxu0
  %v1459 = vadd.f32 %v1370, %v1458
  %v1460 = vpop.f32.mrf.mxu0
  %1461 = vmatprep.mubr.f32.mxu0 0.0
  %1462 = vmatmul.mubr.f32.gmra.mxu0 %v1338
  %v1463 = vpop.f32.mrf.mxu0
  %v1464 = vadd.f32 %v1370, %v1463
  %v1465 = vpop.f32.mrf.mxu0
  %1466 = vmatprep.mubr.f32.mxu0 0.0
  %1467 = vmatmul.mubr.f32.gmra.mxu0 %v1339
  %v1468 = vpop.f32.mrf.mxu0
  %v1469 = vadd.f32 %v1370, %v1468
  %v1470 = vpop.f32.mrf.mxu0
  %1471 = vmatprep.mubr.f32.mxu0 0.0
  %1472 = vmatmul.mubr.f32.gmra.mxu0 %v1340
  %v1473 = vpop.f32.mrf.mxu0
  %v1474 = vadd.f32 %v1370, %v1473
  %v1475 = vpop.f32.mrf.mxu0
  %1476 = vmatprep.mubr.f32.mxu0 0.0
  %1477 = vmatmul.mubr.f32.gmra.mxu0 %v1341
  %v1478 = vpop.f32.mrf.mxu0
  %v1479 = vadd.f32 %v1370, %v1478
  %v1480 = vpop.f32.mrf.mxu0
  %1481 = vmatprep.mubr.f32.mxu0 0.0
  %1482 = vmatmul.mubr.f32.gmra.mxu0 %v1342
  %v1483 = vpop.f32.mrf.mxu0
  %v1484 = vadd.f32 %v1370, %v1483
  %v1485 = vpop.f32.mrf.mxu0
  %1486 = vmatprep.mubr.f32.mxu0 0.0
  %1487 = vmatmul.mubr.f32.gmra.mxu0 %v1343
  %v1488 = vpop.f32.mrf.mxu0
  %v1489 = vadd.f32 %v1370, %v1488
  %v1490 = vpop.f32.mrf.mxu0
  %1491 = vmatprep.mubr.f32.mxu0 0.0
  %1492 = vmatmul.mubr.f32.gmra.mxu0 %v1344
  %v1493 = vpop.f32.mrf.mxu0
  %v1494 = vadd.f32 %v1370, %v1493
  %v1495 = vpop.f32.mrf.mxu0
  %1496 = vmatprep.mubr.f32.mxu0 0.0
  %1497 = vmatmul.mubr.f32.gmra.mxu0 %v1345
  %v1498 = vpop.f32.mrf.mxu0
  %v1499 = vadd.f32 %v1370, %v1498
  %v1500 = vpop.f32.mrf.mxu0
  %1501 = vmatprep.mubr.f32.mxu0 0.0
  %1502 = vmatmul.mubr.f32.gmra.mxu0 %v1346
  %v1503 = vpop.f32.mrf.mxu0
  %v1504 = vadd.f32 %v1370, %v1503
  %v1505 = vpop.f32.mrf.mxu0
  %1506 = vmatprep.mubr.f32.mxu0 0.0
  %1507 = vmatmul.mubr.f32.gmra.mxu0 %v1347
  %v1508 = vpop.f32.mrf.mxu0
  %v1509 = vadd.f32 %v1370, %v1508
  %v1510 = vpop.f32.mrf.mxu0
  %1511 = vmatprep.mubr.f32.mxu0 0.0
  %1512 = vmatmul.mubr.f32.gmra.mxu0 %v1348
  %v1513 = vpop.f32.mrf.mxu0
  %v1514 = vadd.f32 %v1370, %v1513
  %v1515 = vpop.f32.mrf.mxu0
  %1516 = vdwg.mxu0
  %1517 = vst [vmem:[%s17] sm:$0xff] %v1439
  %1518 = vst [vmem:[%s17 + $0x8] sm:$0xff] %v1444
  %1519 = vst [vmem:[%s17 + $0x10] sm:$0xff] %v1449
  %1520 = vst [vmem:[%s17 + $0x18] sm:$0xff] %v1454
  %1521 = vst [vmem:[%s17 + $0x20] sm:$0xff] %v1459
  %1522 = vst [vmem:[%s17 + $0x28] sm:$0xff] %v1464
  %1523 = vst [vmem:[%s17 + $0x30] sm:$0xff] %v1469
  %1524 = vst [vmem:[%s17 + $0x38] sm:$0xff] %v1474
  %1525 = vst [vmem:[%s17 + $0x40] sm:$0xff] %v1479
  %1526 = vst [vmem:[%s17 + $0x48] sm:$0xff] %v1484
  %1527 = vst [vmem:[%s17 + $0x50] sm:$0xff] %v1489
  %1528 = vst [vmem:[%s17 + $0x58] sm:$0xff] %v1494
  %1529 = vst [vmem:[%s17 + $0x60] sm:$0xff] %v1499
  %1530 = vst [vmem:[%s17 + $0x68] sm:$0xff] %v1504
  %1531 = vst [vmem:[%s17 + $0x70] sm:$0xff] %v1509
  %1532 = vst [vmem:[%s17 + $0x78] sm:$0xff] %v1514
  %1533 = vst [vmem:[%s18] sm:$0xff] %v245
  %1534 = vst [vmem:[%s18 + $0x8] sm:$0xff] %v246
  %1535 = vst [vmem:[%s18 + $0x10] sm:$0xff] %v247
  %1536 = vst [vmem:[%s18 + $0x18] sm:$0xff] %v248
  %1537 = vst [vmem:[%s18 + $0x20] sm:$0xff] %v249
  %1538 = vst [vmem:[%s18 + $0x28] sm:$0xff] %v250
  %1539 = vst [vmem:[%s18 + $0x30] sm:$0xff] %v251
  %1540 = vst [vmem:[%s18 + $0x38] sm:$0xff] %v252
  %1541 = vst [vmem:[%s18 + $0x40] sm:$0xff] %v253
  %1542 = vst [vmem:[%s18 + $0x48] sm:$0xff] %v254
  %1543 = vst [vmem:[%s18 + $0x50] sm:$0xff] %v255
  %1544 = vst [vmem:[%s18 + $0x58] sm:$0xff] %v256
  %1545 = vst [vmem:[%s18 + $0x60] sm:$0xff] %v257
  %1546 = vst [vmem:[%s18 + $0x68] sm:$0xff] %v258
  %1547 = vst [vmem:[%s18 + $0x70] sm:$0xff] %v259
  %1548 = vst [vmem:[%s18 + $0x78] sm:$0xff] %v260
  %1549 = vst [vmem:[%s19] sm:$0xff] %v429
  %1550 = vst [vmem:[%s19 + $0x8] sm:$0xff] %v430
  %1551 = vst [vmem:[%s19 + $0x10] sm:$0xff] %v431
  %1552 = vst [vmem:[%s19 + $0x18] sm:$0xff] %v432
  %1553 = vst [vmem:[%s19 + $0x20] sm:$0xff] %v433
  %1554 = vst [vmem:[%s19 + $0x28] sm:$0xff] %v434
  %1555 = vst [vmem:[%s19 + $0x30] sm:$0xff] %v435
  %1556 = vst [vmem:[%s19 + $0x38] sm:$0xff] %v436
  %1557 = vst [vmem:[%s19 + $0x40] sm:$0xff] %v437
  %1558 = vst [vmem:[%s19 + $0x48] sm:$0xff] %v438
  %1559 = vst [vmem:[%s19 + $0x50] sm:$0xff] %v439
  %1560 = vst [vmem:[%s19 + $0x58] sm:$0xff] %v440
  %1561 = vst [vmem:[%s19 + $0x60] sm:$0xff] %v441
  %1562 = vst [vmem:[%s19 + $0x68] sm:$0xff] %v442
  %1563 = vst [vmem:[%s19 + $0x70] sm:$0xff] %v443
  %1564 = vst [vmem:[%s19 + $0x78] sm:$0xff] %v444
  %1565 = vst [vmem:[%s20] sm:$0xff] %v613
  %1566 = vst [vmem:[%s20 + $0x8] sm:$0xff] %v614
  %1567 = vst [vmem:[%s20 + $0x10] sm:$0xff] %v615
  %1568 = vst [vmem:[%s20 + $0x18] sm:$0xff] %v616
  %1569 = vst [vmem:[%s20 + $0x20] sm:$0xff] %v617
  %1570 = vst [vmem:[%s20 + $0x28] sm:$0xff] %v618
  %1571 = vst [vmem:[%s20 + $0x30] sm:$0xff] %v619
  %1572 = vst [vmem:[%s20 + $0x38] sm:$0xff] %v620
  %1573 = vst [vmem:[%s20 + $0x40] sm:$0xff] %v621
  %1574 = vst [vmem:[%s20 + $0x48] sm:$0xff] %v622
  %1575 = vst [vmem:[%s20 + $0x50] sm:$0xff] %v623
  %1576 = vst [vmem:[%s20 + $0x58] sm:$0xff] %v624
  %1577 = vst [vmem:[%s20 + $0x60] sm:$0xff] %v625
  %1578 = vst [vmem:[%s20 + $0x68] sm:$0xff] %v626
  %1579 = vst [vmem:[%s20 + $0x70] sm:$0xff] %v627
  %1580 = vst [vmem:[%s20 + $0x78] sm:$0xff] %v628
  %1581 = vst [vmem:[%s21] sm:$0xff] %v719
  %1582 = vst [vmem:[%s21 + $0x8] sm:$0xff] %v724
  %1583 = vst [vmem:[%s21 + $0x10] sm:$0xff] %v729
  %1584 = vst [vmem:[%s21 + $0x18] sm:$0xff] %v734
  %1585 = vst [vmem:[%s21 + $0x20] sm:$0xff] %v739
  %1586 = vst [vmem:[%s21 + $0x28] sm:$0xff] %v744
  %1587 = vst [vmem:[%s21 + $0x30] sm:$0xff] %v749
  %1588 = vst [vmem:[%s21 + $0x38] sm:$0xff] %v754
  %1589 = vst [vmem:[%s21 + $0x40] sm:$0xff] %v759
  %1590 = vst [vmem:[%s21 + $0x48] sm:$0xff] %v764
  %1591 = vst [vmem:[%s21 + $0x50] sm:$0xff] %v769
  %1592 = vst [vmem:[%s21 + $0x58] sm:$0xff] %v774
  %1593 = vst [vmem:[%s21 + $0x60] sm:$0xff] %v779
  %1594 = vst [vmem:[%s21 + $0x68] sm:$0xff] %v784
  %1595 = vst [vmem:[%s21 + $0x70] sm:$0xff] %v789
  %1596 = vst [vmem:[%s21 + $0x78] sm:$0xff] %v794
  // Predicated region
  $region70: #{ae_forward.1} parent=0 // pred_check
    _
  $region71: #{ae_forward.1} parent=0 // pred_check_branch
    %1598 = sbr.rel (0) target = $region73
  $region72: #{ae_forward.1} parent=0 // pred_region
    _
  $region73: #{ae_forward.1} parent=0 // pred_fallthru
    _
  // Predicated region
  $region74: #{ae_forward.1} parent=0 // pred_check
    _
  $region75: #{ae_forward.1} parent=0 // pred_check_branch
    %1600 = sbr.rel (0) target = $region77
  $region76: #{ae_forward.1} parent=0 // pred_region
    _
  $region77: #{ae_forward.1} parent=0 // pred_fallthru
    _
  // Predicated region
  $region78: #{ae_forward.1} parent=0 // pred_check
    _
  $region79: #{ae_forward.1} parent=0 // pred_check_branch
    %1602 = sbr.rel (0) target = $region81
  $region80: #{ae_forward.1} parent=0 // pred_region
    _
  $region81: #{ae_forward.1} parent=0 // pred_fallthru
    _
  // Predicated region
  $region82: #{ae_forward.1} parent=0 // pred_check
    _
  $region83: #{ae_forward.1} parent=0 // pred_check_branch
    %1604 = sbr.rel (0) target = $region85
  $region84: #{ae_forward.1} parent=0 // pred_region
    _
  $region85: #{ae_forward.1} parent=0 // pred_fallthru
    _
  // Predicated region
  $region86: #{ae_forward.1} parent=0 // pred_check
    _
  $region87: #{ae_forward.1} parent=0 // pred_check_branch
    %1606 = sbr.rel (0) target = $region89
  $region88: #{ae_forward.1} parent=0 // pred_region
    _
  $region89: #{ae_forward.1} parent=0 // pred_fallthru
    _
  // Predicated region
  $region90: #{ae_forward.1} parent=0 // pred_check
    _
  $region91: #{ae_forward.1} parent=0 // pred_check_branch
    %1608 = sbr.rel (0) target = $region93
  $region92: #{ae_forward.1} parent=0 // pred_region
    _
  $region93: #{ae_forward.1} parent=0 // pred_fallthru
    _
  // Predicated region
  $region94: #{ae_forward.1} parent=0 // pred_check
    _
  $region95: #{ae_forward.1} parent=0 // pred_check_branch
    %1610 = sbr.rel (0) target = $region97
  $region96: #{ae_forward.1} parent=0 // pred_region
    _
  $region97: #{ae_forward.1} parent=0 // pred_fallthru
    _
  // Predicated region
  $region98: #{ae_forward.1} parent=0 // pred_check
    _
  $region99: #{ae_forward.1} parent=0 // pred_check_branch
    %1612 = sbr.rel (0) target = $region101
  $region100: #{ae_forward.1} parent=0 // pred_region
    _
  $region101: #{ae_forward.1} parent=0 // pred_fallthru
    _
  // Predicated region
  $region102: #{ae_forward.1} parent=0 // pred_check
    _
  $region103: #{ae_forward.1} parent=0 // pred_check_branch
    %1614 = sbr.rel (0) target = $region105
  $region104: #{ae_forward.1} parent=0 // pred_region
    _
  $region105: #{ae_forward.1} parent=0 // pred_fallthru
    _
  // Predicated region
  $region106: #{ae_forward.1} parent=0 // pred_check
    _
  $region107: #{ae_forward.1} parent=0 // pred_check_branch
    %1616 = sbr.rel (0) target = $region109
  $region108: #{ae_forward.1} parent=0 // pred_region
    _
  $region109: #{ae_forward.1} parent=0 // pred_fallthru
    _

</llo_original>
